<compile_context>
chip_gen: v6e
topology: v6e:2x2x1
jax: 0.10.0
libtpu: 0.0.40
codegen_flags: <defaults>
</compile_context>

<pallas_src>
import numpy as np
import jax
import jax.numpy as jnp
from jax.experimental import pallas as pl
from jax.experimental.pallas import tpu as pltpu


def _round_up(a, m):
    return ((a + m - 1) // m) * m


def _region_leaf_kernel(x_ref, w_ref, o_ref):
    x = x_ref[...]                                     # (TB, K_pad) f32
    finite = jnp.logical_not(jnp.isnan(x))
    valid = finite.astype(jnp.float32)                 # 1.0 for observed features
    xc = jnp.where(finite, x, 0.0)                     # nan_to_num on the inputs

    # Feature slab [-0.5 x^2 | x | 1{valid}]: (TB, 3*K_pad).  Each chunk is a
    # multiple of 128 lanes, so the concat is tile-aligned.
    feats = jnp.concatenate([-0.5 * xc * xc, xc, valid], axis=-1)

    o_ref[...] = jnp.dot(feats, w_ref[...],
                         preferred_element_type=jnp.float32,
                         precision=jax.lax.Precision.HIGHEST)


def region_graph_gaussian_forward(x, mask, pad_mask, loc, scale, *, block_b=512):
    """x: (B, F); mask: (R, D) int32; pad_mask: (R, 1, D) bool;
       loc, scale: (R, C, D) f32  ->  (B, R, C) f32 log-likelihoods."""
    x = x.astype(jnp.float32)
    loc = loc.astype(jnp.float32)
    scale = scale.astype(jnp.float32)

    B, _ = x.shape
    R, C, D = loc.shape
    K, N = R * D, R * C
    K_pad = _round_up(K, 128)
    N_pad = _round_up(N, 128)

    # ---- static (weight-only) preprocessing: hoisted out of the kernel ----
    inv_var = 1.0 / (scale * scale)                                    # (R, C, D)
    wa = inv_var                                                       # * (-0.5 x^2)
    wb = loc * inv_var                                                 # * x
    wc = (-0.5 * loc * loc * inv_var
          - jnp.log(scale) - 0.5 * jnp.log(2.0 * jnp.pi))              # * 1{valid}
    keep = 1.0 - pad_mask.astype(jnp.float32)                          # (R, 1, D)
    wa, wb, wc = wa * keep, wb * keep, wc * keep                       # masked_fill(pad) = 0

    eye = jnp.eye(R, dtype=jnp.float32)

    def block_diag(w):                                                 # (R,C,D) -> (K_pad, N_pad)
        big = jnp.einsum('rcd,rs->rdsc', w, eye).reshape(K, N)
        return jnp.pad(big, ((0, K_pad - K), (0, N_pad - N)))

    # NOTE: block-diagonal packing trades weight memory (x R) for a lane-dense
    # MXU matmul; 3 * K_pad * N_pad * 4 B stays well under the 32 MiB scoped
    # VMEM budget (v7x included) for typical RAT-SPN leaf sizes.
    W = jnp.concatenate([block_diag(wa), block_diag(wb), block_diag(wc)],
                        axis=0)                                        # (3*K_pad, N_pad)

    # ---- per-batch glue: gather features by region mask (layout plumbing) ----
    xg = x[:, mask.reshape(-1)]                                        # (B, K)
    xg = jnp.pad(xg, ((0, 0), (0, K_pad - K)))                         # lane-pad (zeros x zero weight rows)

    TB = block_b if B >= block_b else _round_up(B, 8)
    B_pad = _round_up(B, TB)
    xg = jnp.pad(xg, ((0, B_pad - B), (0, 0)))

    out = pl.pallas_call(
        _region_leaf_kernel,
        out_shape=jax.ShapeDtypeStruct((B_pad, N_pad), jnp.float32),
        grid=(B_pad // TB,),
        in_specs=[
            pl.BlockSpec((TB, K_pad), lambda i: (i, 0)),
            pl.BlockSpec((3 * K_pad, N_pad), lambda i: (0, 0)),
        ],
        out_specs=pl.BlockSpec((TB, N_pad), lambda i: (i, 0)),
        compiler_params=pltpu.CompilerParams(
            dimension_semantics=("parallel",)),
    )(xg, W)

    return out[:B, :N].reshape(B, R, C)


def reference_forward(x, mask, pad_mask, loc, scale):
    """Pure-JAX mirror of RegionGraphLayer.forward with Gaussian leaves (eval mode)."""
    xg = x[:, mask]                                   # (B, R, D)
    xg = xg[:, :, None, :]                            # (B, R, 1, D)
    ll = (-0.5 * jnp.square((xg - loc) / scale)
          - jnp.log(scale) - 0.5 * jnp.log(2.0 * jnp.pi))   # (B, R, C, D)
    ll = jnp.nan_to_num(ll)
    ll = jnp.where(pad_mask[None, :, :, :], 0.0, ll)
    return jnp.sum(ll, axis=-1)                       # (B, R, C)


if __name__ == "__main__":
    # Small, deterministic hyperparameters consistent with RegionGraphLayer.__init__
    in_features = 15
    rg_depth = 2
    num_repetitions = 2
    out_channels = 8
    batch = 8

    pad = -in_features % (2 ** rg_depth)                  # 1
    in_features_pad = in_features + pad                   # 16
    dimension = in_features_pad // (2 ** rg_depth)        # 4

    # Deterministic region graph: each repetition is a fixed permutation of the
    # features split into 2**rg_depth chunks; short chunks are padded by
    # repeating their last feature index (exactly like the PyTorch __init__).
    perms = [list(range(in_features)), list(reversed(range(in_features)))]
    regions = []
    for p in perms[:num_repetitions]:
        for q in range(2 ** rg_depth):
            regions.append(tuple(p[q * dimension:(q + 1) * dimension]))
    R = len(regions)                                       # 8

    mask_np = np.zeros((R, dimension), dtype=np.int32)
    pad_mask_np = np.zeros((R, 1, dimension), dtype=np.bool_)
    for i, reg in enumerate(regions):
        n_dummy = dimension - len(reg)
        mask_np[i] = np.asarray(list(reg) + [reg[-1]] * n_dummy, dtype=np.int32)
        if n_dummy > 0:
            pad_mask_np[i, 0, dimension - n_dummy:] = True

    mask = jnp.asarray(mask_np)
    pad_mask = jnp.asarray(pad_mask_np)

    key = jax.random.PRNGKey(0)
    kx, kl, ks = jax.random.split(key, 3)
    loc = jax.random.normal(kl, (R, out_channels, dimension), dtype=jnp.float32)
    scale = jnp.exp(0.25 * jax.random.normal(ks, (R, out_channels, dimension),
                                             dtype=jnp.float32))

    x = jax.random.normal(kx, (batch, in_features), dtype=jnp.float32)
    # Marginalize a couple of random variables with NaN, as the SPN allows.
    x = x.at[0, 3].set(jnp.nan).at[5, 10].set(jnp.nan)

    out = region_graph_gaussian_forward(x, mask, pad_mask, loc, scale)
    out = jax.block_until_ready(out)

    ref = reference_forward(x, mask, pad_mask, loc, scale)
    assert out.shape == (batch, R, out_channels), out.shape
    assert bool(jnp.all(jnp.isfinite(out))), "non-finite output"
    assert jnp.allclose(out, ref, atol=1e-4, rtol=1e-4), (out, ref)

    print("KERNEL_OK")
</pallas_src>

<mosaic_0001>
module attributes {stable_mosaic.version = 11 : i64} {
  func.func @_region_leaf_kernel(%arg0: i32, %arg1: memref<8x128xf32, #tpu.memory_space<vmem>>, %arg2: memref<384x128xf32, #tpu.memory_space<vmem>>, %arg3: memref<8x128xf32, #tpu.memory_space<vmem>>) attributes {dimension_semantics = [#tpu.dimension_semantics<parallel>], iteration_bounds = array<i64: 1>, scalar_prefetch = 0 : i64, scratch_operands = 0 : i64, tpu.core_type = #tpu.core_type<tc>, window_params = [{transform_indices = @transform_0, window_bounds = array<i64: 8, 128>}, {pipeline_mode = #tpu.pipeline_mode<synchronous>, transform_indices = @transform_1, window_bounds = array<i64: 384, 128>}, {transform_indices = @transform_2, window_bounds = array<i64: 8, 128>}]} {
    %c0 = arith.constant 0 : index
    %c0_0 = arith.constant 0 : index
    %0 = vector.load %arg1[%c0, %c0_0] : memref<8x128xf32, #tpu.memory_space<vmem>>, vector<8x128xf32>
    %1 = arith.cmpf one, %0, %0 : vector<8x128xf32>
    %cst = arith.constant dense<true> : vector<8x128xi1>
    %2 = arith.xori %1, %cst : vector<8x128xi1>
    %3 = arith.extui %2 : vector<8x128xi1> to vector<8x128xi32>
    %4 = arith.sitofp %3 : vector<8x128xi32> to vector<8x128xf32>
    %cst_1 = arith.constant 0.000000e+00 : f32
    %5 = vector.broadcast %cst_1 : f32 to vector<8x128xf32>
    %6 = arith.select %2, %0, %5 : vector<8x128xi1>, vector<8x128xf32>
    %cst_2 = arith.constant -5.000000e-01 : f32
    %7 = vector.broadcast %cst_2 : f32 to vector<8x128xf32>
    %8 = arith.mulf %7, %6 : vector<8x128xf32>
    %9 = arith.mulf %8, %6 : vector<8x128xf32>
    %10 = tpu.concatenate %9, %6, %4 in 1 : vector<8x128xf32>, vector<8x128xf32>, vector<8x128xf32> -> vector<8x384xf32>
    %c0_3 = arith.constant 0 : index
    %c0_4 = arith.constant 0 : index
    %11 = vector.load %arg2[%c0_3, %c0_4] : memref<384x128xf32, #tpu.memory_space<vmem>>, vector<384x128xf32>
    %cst_5 = arith.constant dense<0.000000e+00> : vector<8x128xf32>
    %12 = tpu.matmul %10, %11, %cst_5 {dimension_numbers = #tpu.dot_dimension_numbers<[1], [0], [0], [1], [0, 0, 1, 1], [], []>, precision = #tpu.contract_precision<fp32>} : vector<8x384xf32>, vector<384x128xf32>, vector<8x128xf32> -> vector<8x128xf32>
    %c0_6 = arith.constant 0 : index
    %c0_7 = arith.constant 0 : index
    %13 = vector.load %arg3[%c0_6, %c0_7] : memref<8x128xf32, #tpu.memory_space<vmem>>, vector<8x128xf32>
    tpu.vector_store %arg3[%c0_6, %c0_7], %12 {strides = array<i32>} : memref<8x128xf32, #tpu.memory_space<vmem>>, vector<8x128xf32>,
    return
  }
  func.func @transform_0(%arg0: i32) -> (i32, i32) {
    %c0_i32 = arith.constant 0 : i32
    %c0_i32_0 = arith.constant 0 : i32
    return %arg0, %c0_i32 : i32, i32
  }
  func.func @transform_1(%arg0: i32) -> (i32, i32) {
    %c0_i32 = arith.constant 0 : i32
    %c0_i32_0 = arith.constant 0 : i32
    %c0_i32_1 = arith.constant 0 : i32
    return %c0_i32, %c0_i32_0 : i32, i32
  }
  func.func @transform_2(%arg0: i32) -> (i32, i32) {
    %c0_i32 = arith.constant 0 : i32
    %c0_i32_0 = arith.constant 0 : i32
    return %arg0, %c0_i32 : i32, i32
  }
}

</mosaic_0001>

<llo_original>
// kernel: tpu_custom_call.1
$region0: #{tpu_custom_call.1}
  #allocation0 [shape = 'u32[]', space=smem, size = 0x4, offset = 0x4, fixed_abs, tag = 'smem constant byte address 0x4 - core index']
  #allocation1 [shape = 'u32[144,128]{1,0:T(1,128)}', space=vmem, size = 0x12000, scoped, tag = 'internal scratch']
  %s0 = inlined_call_operand.hbm [shape: f32[8,128], index: 0, kind: input, shape index: {}]
  %s1 = inlined_call_operand.hbm [shape: f32[384,128], index: 1, kind: input, shape index: {}]
  %s2 = inlined_call_operand.hbm [shape: f32[8,128], index: 2, kind: output, shape index: {}]
  %s3 = sld [smem:[#allocation0]]
  $region26: #{tpu_custom_call.1} parent=0
    _
  %s5 = ssub.s32 1, %s3
  %s6 = scalar_select 0, %s5, %s3
  $region1: #{tpu_custom_call.1} parent=0
    #allocation2 [shape = 'u8[4096]{0}', space=vmem, size = 0x1000, scoped, tag = 'input window, operand 0, single buffered']
    #allocation3 [shape = 's32[1]{0}', space=sflag, size = 0x4, scoped, tag = 'scoped memory for tpu_custom_call.1']
    #allocation4 [shape = 's32[1]{0}', space=sflag, size = 0x4, scoped, tag = 'scoped memory for tpu_custom_call.1']
    #allocation5 [shape = 'u8[196608]{0}', space=vmem, size = 0x30000, scoped, tag = 'input window, operand 1, single buffered']
    #allocation6 [shape = 's32[1]{0}', space=sflag, size = 0x4, scoped, tag = 'scoped memory for tpu_custom_call.1']
    #allocation7 [shape = 'u8[4096]{0}', space=vmem, size = 0x1000, scoped, tag = 'output window, operand 0, single buffered']
    %7 = vsyncpa [#allocation3], 0
    %8 = vsyncpa [#allocation6], 0
    %9 = vsyncpa [#allocation4], 0
    // Predicated region
    $region2: #{tpu_custom_call.1} parent=1 // pred_check
      _
    $region3: #{tpu_custom_call.1} parent=1 // pred_check_branch
      %11 = sbr.rel (0) target = $region5
    $region4: #{tpu_custom_call.1} parent=1 // pred_region
      %s13 = ssub.s32 128, 128
      %14 = vsyncadd [#allocation3], %s13
      %s16 = sshll.u32 [#allocation2], 4
      %s17 = int_to_ptr.vmem [resolvable:$true] %s16
      %19 = dma.hbm_to_vmem [thread:$0]  %s0, 128, %s17, [#allocation3]
    $region5: #{tpu_custom_call.1} parent=1 // pred_fallthru
      _
    // Predicated region
    $region6: #{tpu_custom_call.1} parent=1 // pred_check
      _
    $region7: #{tpu_custom_call.1} parent=1 // pred_check_branch
      %21 = sbr.rel (0) target = $region9
    $region8: #{tpu_custom_call.1} parent=1 // pred_region
      %s23 = ssub.s32 6144, 6144
      %24 = vsyncadd [#allocation6], %s23
      %s25 = sshll.u32 [#allocation5], 4
      %s26 = int_to_ptr.vmem [resolvable:$true] %s25
      %31 = dma.hbm_to_vmem [thread:$0]  %s1, 6144, %s26, [#allocation6], 128, 128, 8
    $region9: #{tpu_custom_call.1} parent=1 // pred_fallthru
      _
    // Predicated region
    $region10: #{tpu_custom_call.1} parent=1 // pred_check
      _
    $region11: #{tpu_custom_call.1} parent=1 // pred_check_branch
      %33 = sbr.rel (0) target = $region13
    $region12: #{tpu_custom_call.1} parent=1 // pred_region
      %34 = dma.done [#allocation3], 128
    $region13: #{tpu_custom_call.1} parent=1 // pred_fallthru
      _
    // Predicated region
    $region14: #{tpu_custom_call.1} parent=1 // pred_check
      _
    $region15: #{tpu_custom_call.1} parent=1 // pred_check_branch
      %36 = sbr.rel (0) target = $region17
    $region16: #{tpu_custom_call.1} parent=1 // pred_region
      %37 = dma.done [#allocation6], 6144
    $region17: #{tpu_custom_call.1} parent=1 // pred_fallthru
      _
    %v38 = vld [vmem:[#allocation2] sm:$0xff]
    %vm39 = vcmp.ne.f32.partialorder %v38, %v38
    %vm40 = vmxor %vm39, 1
    %v41 = vsel %vm40, 1, 0
    %v42 = vcvt.s32.f32 %v41
    %v43 = vsel %vm40, %v38, 0.0
    %v44 = vmul.f32 %v43, -0.5
    %v45 = vmul.f32 %v44, %v43
    %v46 = vld [vmem:[#allocation5] sm:$0xff]
    %v47 = vld [vmem:[#allocation5 + $0x8] sm:$0xff]
    %v48 = vld [vmem:[#allocation5 + $0x10] sm:$0xff]
    %v49 = vld [vmem:[#allocation5 + $0x18] sm:$0xff]
    %v50 = vld [vmem:[#allocation5 + $0x20] sm:$0xff]
    %v51 = vld [vmem:[#allocation5 + $0x28] sm:$0xff]
    %v52 = vld [vmem:[#allocation5 + $0x30] sm:$0xff]
    %v53 = vld [vmem:[#allocation5 + $0x38] sm:$0xff]
    %v54 = vld [vmem:[#allocation5 + $0x40] sm:$0xff]
    %v55 = vld [vmem:[#allocation5 + $0x48] sm:$0xff]
    %v56 = vld [vmem:[#allocation5 + $0x50] sm:$0xff]
    %v57 = vld [vmem:[#allocation5 + $0x58] sm:$0xff]
    %v58 = vld [vmem:[#allocation5 + $0x60] sm:$0xff]
    %v59 = vld [vmem:[#allocation5 + $0x68] sm:$0xff]
    %v60 = vld [vmem:[#allocation5 + $0x70] sm:$0xff]
    %v61 = vld [vmem:[#allocation5 + $0x78] sm:$0xff]
    %v62 = vld [vmem:[#allocation5 + $0x80] sm:$0xff]
    %v63 = vld [vmem:[#allocation5 + $0x88] sm:$0xff]
    %v64 = vld [vmem:[#allocation5 + $0x90] sm:$0xff]
    %v65 = vld [vmem:[#allocation5 + $0x98] sm:$0xff]
    %v66 = vld [vmem:[#allocation5 + $0xa0] sm:$0xff]
    %v67 = vld [vmem:[#allocation5 + $0xa8] sm:$0xff]
    %v68 = vld [vmem:[#allocation5 + $0xb0] sm:$0xff]
    %v69 = vld [vmem:[#allocation5 + $0xb8] sm:$0xff]
    %v70 = vld [vmem:[#allocation5 + $0xc0] sm:$0xff]
    %v71 = vld [vmem:[#allocation5 + $0xc8] sm:$0xff]
    %v72 = vld [vmem:[#allocation5 + $0xd0] sm:$0xff]
    %v73 = vld [vmem:[#allocation5 + $0xd8] sm:$0xff]
    %v74 = vld [vmem:[#allocation5 + $0xe0] sm:$0xff]
    %v75 = vld [vmem:[#allocation5 + $0xe8] sm:$0xff]
    %v76 = vld [vmem:[#allocation5 + $0xf0] sm:$0xff]
    %v77 = vld [vmem:[#allocation5 + $0xf8] sm:$0xff]
    %v78 = vld [vmem:[#allocation5 + $0x100] sm:$0xff]
    %v79 = vld [vmem:[#allocation5 + $0x108] sm:$0xff]
    %v80 = vld [vmem:[#allocation5 + $0x110] sm:$0xff]
    %v81 = vld [vmem:[#allocation5 + $0x118] sm:$0xff]
    %v82 = vld [vmem:[#allocation5 + $0x120] sm:$0xff]
    %v83 = vld [vmem:[#allocation5 + $0x128] sm:$0xff]
    %v84 = vld [vmem:[#allocation5 + $0x130] sm:$0xff]
    %v85 = vld [vmem:[#allocation5 + $0x138] sm:$0xff]
    %v86 = vld [vmem:[#allocation5 + $0x140] sm:$0xff]
    %v87 = vld [vmem:[#allocation5 + $0x148] sm:$0xff]
    %v88 = vld [vmem:[#allocation5 + $0x150] sm:$0xff]
    %v89 = vld [vmem:[#allocation5 + $0x158] sm:$0xff]
    %v90 = vld [vmem:[#allocation5 + $0x160] sm:$0xff]
    %v91 = vld [vmem:[#allocation5 + $0x168] sm:$0xff]
    %v92 = vld [vmem:[#allocation5 + $0x170] sm:$0xff]
    %v93 = vld [vmem:[#allocation5 + $0x178] sm:$0xff]
    %94 = vmatprep.subr.mxu0 0.0
    %v95 = vand.u32 %v61, 4294901760
    %96 = vmatpush1.msra.mxu0 %v95
    %97 = vmatprep.subr.mxu0 0.0
    %v98 = vand.u32 %v60, 4294901760
    %99 = vmatpush1.msra.mxu0 %v98
    %100 = vmatprep.subr.mxu0 0.0
    %v101 = vand.u32 %v59, 4294901760
    %102 = vmatpush1.msra.mxu0 %v101
    %103 = vmatprep.subr.mxu0 0.0
    %v104 = vand.u32 %v58, 4294901760
    %105 = vmatpush1.msra.mxu0 %v104
    %106 = vmatprep.subr.mxu0 0.0
    %v107 = vand.u32 %v57, 4294901760
    %108 = vmatpush1.msra.mxu0 %v107
    %109 = vmatprep.subr.mxu0 0.0
    %v110 = vand.u32 %v56, 4294901760
    %111 = vmatpush1.msra.mxu0 %v110
    %112 = vmatprep.subr.mxu0 0.0
    %v113 = vand.u32 %v55, 4294901760
    %114 = vmatpush1.msra.mxu0 %v113
    %115 = vmatprep.subr.mxu0 0.0
    %v116 = vand.u32 %v54, 4294901760
    %117 = vmatpush1.msra.mxu0 %v116
    %118 = vmatprep.subr.mxu0 0.0
    %v119 = vand.u32 %v53, 4294901760
    %120 = vmatpush1.msra.mxu0 %v119
    %121 = vmatprep.subr.mxu0 0.0
    %v122 = vand.u32 %v52, 4294901760
    %123 = vmatpush1.msra.mxu0 %v122
    %124 = vmatprep.subr.mxu0 0.0
    %v125 = vand.u32 %v51, 4294901760
    %126 = vmatpush1.msra.mxu0 %v125
    %127 = vmatprep.subr.mxu0 0.0
    %v128 = vand.u32 %v50, 4294901760
    %129 = vmatpush1.msra.mxu0 %v128
    %130 = vmatprep.subr.mxu0 0.0
    %v131 = vand.u32 %v49, 4294901760
    %132 = vmatpush1.msra.mxu0 %v131
    %133 = vmatprep.subr.mxu0 0.0
    %v134 = vand.u32 %v48, 4294901760
    %135 = vmatpush1.msra.mxu0 %v134
    %136 = vmatprep.subr.mxu0 0.0
    %v137 = vand.u32 %v47, 4294901760
    %138 = vmatpush1.msra.mxu0 %v137
    %139 = vmatprep.subr.mxu0 0.0
    %v140 = vand.u32 %v46, 4294901760
    %141 = vmatpush1.msra.mxu0 %v140
    %142 = vmatprep.subr.mxu0 0.0
    %v143 = vand.u32 %v77, 4294901760
    %144 = vmatpush2.msra.mxu0 %v143
    %145 = vmatprep.subr.mxu0 0.0
    %v146 = vand.u32 %v76, 4294901760
    %147 = vmatpush2.msra.mxu0 %v146
    %148 = vmatprep.subr.mxu0 0.0
    %v149 = vand.u32 %v75, 4294901760
    %150 = vmatpush2.msra.mxu0 %v149
    %151 = vmatprep.subr.mxu0 0.0
    %v152 = vand.u32 %v74, 4294901760
    %153 = vmatpush2.msra.mxu0 %v152
    %154 = vmatprep.subr.mxu0 0.0
    %v155 = vand.u32 %v73, 4294901760
    %156 = vmatpush2.msra.mxu0 %v155
    %157 = vmatprep.subr.mxu0 0.0
    %v158 = vand.u32 %v72, 4294901760
    %159 = vmatpush2.msra.mxu0 %v158
    %160 = vmatprep.subr.mxu0 0.0
    %v161 = vand.u32 %v71, 4294901760
    %162 = vmatpush2.msra.mxu0 %v161
    %163 = vmatprep.subr.mxu0 0.0
    %v164 = vand.u32 %v70, 4294901760
    %165 = vmatpush2.msra.mxu0 %v164
    %166 = vmatprep.subr.mxu0 0.0
    %v167 = vand.u32 %v69, 4294901760
    %168 = vmatpush2.msra.mxu0 %v167
    %169 = vmatprep.subr.mxu0 0.0
    %v170 = vand.u32 %v68, 4294901760
    %171 = vmatpush2.msra.mxu0 %v170
    %172 = vmatprep.subr.mxu0 0.0
    %v173 = vand.u32 %v67, 4294901760
    %174 = vmatpush2.msra.mxu0 %v173
    %175 = vmatprep.subr.mxu0 0.0
    %v176 = vand.u32 %v66, 4294901760
    %177 = vmatpush2.msra.mxu0 %v176
    %178 = vmatprep.subr.mxu0 0.0
    %v179 = vand.u32 %v65, 4294901760
    %180 = vmatpush2.msra.mxu0 %v179
    %181 = vmatprep.subr.mxu0 0.0
    %v182 = vand.u32 %v64, 4294901760
    %183 = vmatpush2.msra.mxu0 %v182
    %184 = vmatprep.subr.mxu0 0.0
    %v185 = vand.u32 %v63, 4294901760
    %186 = vmatpush2.msra.mxu0 %v185
    %187 = vmatprep.subr.mxu0 0.0
    %v188 = vand.u32 %v62, 4294901760
    %189 = vmatpush2.msra.mxu0 %v188
    %v190 = vand.u32 %v43, 4294901760
    %v191 = vsub.f32 %v43, %v190
    %v192 = vand.u32 %v191, 4294901760
    %v193 = vsub.f32 %v191, %v192
    %v194 = vand.u32 %v193, 4294901760
    %195 = vmatprep.mubr.f32.mxu0 %v194
    %v196 = vand.u32 %v45, 4294901760
    %v197 = vsub.f32 %v45, %v196
    %v198 = vand.u32 %v197, 4294901760
    %v199 = vsub.f32 %v197, %v198
    %v200 = vand.u32 %v199, 4294901760
    %201 = vmatmul.mubr.f32.gmra.mxu0 %v200
    %v202 = vpop.f32.mrf.mxu0
    %v203 = vadd.f32 0.0, %v202
    %v204 = vpop.f32.mrf.mxu0
    %205 = vdwg.mxu0
    %206 = vmatprep.subr.mxu0 0.0
    %v207 = vand.u32 %v61, 4294901760
    %v208 = vsub.f32 %v61, %v207
    %v209 = vand.u32 %v208, 4294901760
    %v210 = vsub.f32 %v208, %v209
    %v211 = vand.u32 %v210, 4294901760
    %212 = vmatpush1.msra.mxu0 %v211
    %213 = vmatprep.subr.mxu0 0.0
    %v214 = vand.u32 %v60, 4294901760
    %v215 = vsub.f32 %v60, %v214
    %v216 = vand.u32 %v215, 4294901760
    %v217 = vsub.f32 %v215, %v216
    %v218 = vand.u32 %v217, 4294901760
    %219 = vmatpush1.msra.mxu0 %v218
    %220 = vmatprep.subr.mxu0 0.0
    %v221 = vand.u32 %v59, 4294901760
    %v222 = vsub.f32 %v59, %v221
    %v223 = vand.u32 %v222, 4294901760
    %v224 = vsub.f32 %v222, %v223
    %v225 = vand.u32 %v224, 4294901760
    %226 = vmatpush1.msra.mxu0 %v225
    %227 = vmatprep.subr.mxu0 0.0
    %v228 = vand.u32 %v58, 4294901760
    %v229 = vsub.f32 %v58, %v228
    %v230 = vand.u32 %v229, 4294901760
    %v231 = vsub.f32 %v229, %v230
    %v232 = vand.u32 %v231, 4294901760
    %233 = vmatpush1.msra.mxu0 %v232
    %234 = vmatprep.subr.mxu0 0.0
    %v235 = vand.u32 %v57, 4294901760
    %v236 = vsub.f32 %v57, %v235
    %v237 = vand.u32 %v236, 4294901760
    %v238 = vsub.f32 %v236, %v237
    %v239 = vand.u32 %v238, 4294901760
    %240 = vmatpush1.msra.mxu0 %v239
    %241 = vmatprep.subr.mxu0 0.0
    %v242 = vand.u32 %v56, 4294901760
    %v243 = vsub.f32 %v56, %v242
    %v244 = vand.u32 %v243, 4294901760
    %v245 = vsub.f32 %v243, %v244
    %v246 = vand.u32 %v245, 4294901760
    %247 = vmatpush1.msra.mxu0 %v246
    %248 = vmatprep.subr.mxu0 0.0
    %v249 = vand.u32 %v55, 4294901760
    %v250 = vsub.f32 %v55, %v249
    %v251 = vand.u32 %v250, 4294901760
    %v252 = vsub.f32 %v250, %v251
    %v253 = vand.u32 %v252, 4294901760
    %254 = vmatpush1.msra.mxu0 %v253
    %255 = vmatprep.subr.mxu0 0.0
    %v256 = vand.u32 %v54, 4294901760
    %v257 = vsub.f32 %v54, %v256
    %v258 = vand.u32 %v257, 4294901760
    %v259 = vsub.f32 %v257, %v258
    %v260 = vand.u32 %v259, 4294901760
    %261 = vmatpush1.msra.mxu0 %v260
    %262 = vmatprep.subr.mxu0 0.0
    %v263 = vand.u32 %v53, 4294901760
    %v264 = vsub.f32 %v53, %v263
    %v265 = vand.u32 %v264, 4294901760
    %v266 = vsub.f32 %v264, %v265
    %v267 = vand.u32 %v266, 4294901760
    %268 = vmatpush1.msra.mxu0 %v267
    %269 = vmatprep.subr.mxu0 0.0
    %v270 = vand.u32 %v52, 4294901760
    %v271 = vsub.f32 %v52, %v270
    %v272 = vand.u32 %v271, 4294901760
    %v273 = vsub.f32 %v271, %v272
    %v274 = vand.u32 %v273, 4294901760
    %275 = vmatpush1.msra.mxu0 %v274
    %276 = vmatprep.subr.mxu0 0.0
    %v277 = vand.u32 %v51, 4294901760
    %v278 = vsub.f32 %v51, %v277
    %v279 = vand.u32 %v278, 4294901760
    %v280 = vsub.f32 %v278, %v279
    %v281 = vand.u32 %v280, 4294901760
    %282 = vmatpush1.msra.mxu0 %v281
    %283 = vmatprep.subr.mxu0 0.0
    %v284 = vand.u32 %v50, 4294901760
    %v285 = vsub.f32 %v50, %v284
    %v286 = vand.u32 %v285, 4294901760
    %v287 = vsub.f32 %v285, %v286
    %v288 = vand.u32 %v287, 4294901760
    %289 = vmatpush1.msra.mxu0 %v288
    %290 = vmatprep.subr.mxu0 0.0
    %v291 = vand.u32 %v49, 4294901760
    %v292 = vsub.f32 %v49, %v291
    %v293 = vand.u32 %v292, 4294901760
    %v294 = vsub.f32 %v292, %v293
    %v295 = vand.u32 %v294, 4294901760
    %296 = vmatpush1.msra.mxu0 %v295
    %297 = vmatprep.subr.mxu0 0.0
    %v298 = vand.u32 %v48, 4294901760
    %v299 = vsub.f32 %v48, %v298
    %v300 = vand.u32 %v299, 4294901760
    %v301 = vsub.f32 %v299, %v300
    %v302 = vand.u32 %v301, 4294901760
    %303 = vmatpush1.msra.mxu0 %v302
    %304 = vmatprep.subr.mxu0 0.0
    %v305 = vand.u32 %v47, 4294901760
    %v306 = vsub.f32 %v47, %v305
    %v307 = vand.u32 %v306, 4294901760
    %v308 = vsub.f32 %v306, %v307
    %v309 = vand.u32 %v308, 4294901760
    %310 = vmatpush1.msra.mxu0 %v309
    %311 = vmatprep.subr.mxu0 0.0
    %v312 = vand.u32 %v46, 4294901760
    %v313 = vsub.f32 %v46, %v312
    %v314 = vand.u32 %v313, 4294901760
    %v315 = vsub.f32 %v313, %v314
    %v316 = vand.u32 %v315, 4294901760
    %317 = vmatpush1.msra.mxu0 %v316
    %318 = vmatprep.subr.mxu0 0.0
    %v319 = vand.u32 %v77, 4294901760
    %v320 = vsub.f32 %v77, %v319
    %v321 = vand.u32 %v320, 4294901760
    %v322 = vsub.f32 %v320, %v321
    %v323 = vand.u32 %v322, 4294901760
    %324 = vmatpush2.msra.mxu0 %v323
    %325 = vmatprep.subr.mxu0 0.0
    %v326 = vand.u32 %v76, 4294901760
    %v327 = vsub.f32 %v76, %v326
    %v328 = vand.u32 %v327, 4294901760
    %v329 = vsub.f32 %v327, %v328
    %v330 = vand.u32 %v329, 4294901760
    %331 = vmatpush2.msra.mxu0 %v330
    %332 = vmatprep.subr.mxu0 0.0
    %v333 = vand.u32 %v75, 4294901760
    %v334 = vsub.f32 %v75, %v333
    %v335 = vand.u32 %v334, 4294901760
    %v336 = vsub.f32 %v334, %v335
    %v337 = vand.u32 %v336, 4294901760
    %338 = vmatpush2.msra.mxu0 %v337
    %339 = vmatprep.subr.mxu0 0.0
    %v340 = vand.u32 %v74, 4294901760
    %v341 = vsub.f32 %v74, %v340
    %v342 = vand.u32 %v341, 4294901760
    %v343 = vsub.f32 %v341, %v342
    %v344 = vand.u32 %v343, 4294901760
    %345 = vmatpush2.msra.mxu0 %v344
    %346 = vmatprep.subr.mxu0 0.0
    %v347 = vand.u32 %v73, 4294901760
    %v348 = vsub.f32 %v73, %v347
    %v349 = vand.u32 %v348, 4294901760
    %v350 = vsub.f32 %v348, %v349
    %v351 = vand.u32 %v350, 4294901760
    %352 = vmatpush2.msra.mxu0 %v351
    %353 = vmatprep.subr.mxu0 0.0
    %v354 = vand.u32 %v72, 4294901760
    %v355 = vsub.f32 %v72, %v354
    %v356 = vand.u32 %v355, 4294901760
    %v357 = vsub.f32 %v355, %v356
    %v358 = vand.u32 %v357, 4294901760
    %359 = vmatpush2.msra.mxu0 %v358
    %360 = vmatprep.subr.mxu0 0.0
    %v361 = vand.u32 %v71, 4294901760
    %v362 = vsub.f32 %v71, %v361
    %v363 = vand.u32 %v362, 4294901760
    %v364 = vsub.f32 %v362, %v363
    %v365 = vand.u32 %v364, 4294901760
    %366 = vmatpush2.msra.mxu0 %v365
    %367 = vmatprep.subr.mxu0 0.0
    %v368 = vand.u32 %v70, 4294901760
    %v369 = vsub.f32 %v70, %v368
    %v370 = vand.u32 %v369, 4294901760
    %v371 = vsub.f32 %v369, %v370
    %v372 = vand.u32 %v371, 4294901760
    %373 = vmatpush2.msra.mxu0 %v372
    %374 = vmatprep.subr.mxu0 0.0
    %v375 = vand.u32 %v69, 4294901760
    %v376 = vsub.f32 %v69, %v375
    %v377 = vand.u32 %v376, 4294901760
    %v378 = vsub.f32 %v376, %v377
    %v379 = vand.u32 %v378, 4294901760
    %380 = vmatpush2.msra.mxu0 %v379
    %381 = vmatprep.subr.mxu0 0.0
    %v382 = vand.u32 %v68, 4294901760
    %v383 = vsub.f32 %v68, %v382
    %v384 = vand.u32 %v383, 4294901760
    %v385 = vsub.f32 %v383, %v384
    %v386 = vand.u32 %v385, 4294901760
    %387 = vmatpush2.msra.mxu0 %v386
    %388 = vmatprep.subr.mxu0 0.0
    %v389 = vand.u32 %v67, 4294901760
    %v390 = vsub.f32 %v67, %v389
    %v391 = vand.u32 %v390, 4294901760
    %v392 = vsub.f32 %v390, %v391
    %v393 = vand.u32 %v392, 4294901760
    %394 = vmatpush2.msra.mxu0 %v393
    %395 = vmatprep.subr.mxu0 0.0
    %v396 = vand.u32 %v66, 4294901760
    %v397 = vsub.f32 %v66, %v396
    %v398 = vand.u32 %v397, 4294901760
    %v399 = vsub.f32 %v397, %v398
    %v400 = vand.u32 %v399, 4294901760
    %401 = vmatpush2.msra.mxu0 %v400
    %402 = vmatprep.subr.mxu0 0.0
    %v403 = vand.u32 %v65, 4294901760
    %v404 = vsub.f32 %v65, %v403
    %v405 = vand.u32 %v404, 4294901760
    %v406 = vsub.f32 %v404, %v405
    %v407 = vand.u32 %v406, 4294901760
    %408 = vmatpush2.msra.mxu0 %v407
    %409 = vmatprep.subr.mxu0 0.0
    %v410 = vand.u32 %v64, 4294901760
    %v411 = vsub.f32 %v64, %v410
    %v412 = vand.u32 %v411, 4294901760
    %v413 = vsub.f32 %v411, %v412
    %v414 = vand.u32 %v413, 4294901760
    %415 = vmatpush2.msra.mxu0 %v414
    %416 = vmatprep.subr.mxu0 0.0
    %v417 = vand.u32 %v63, 4294901760
    %v418 = vsub.f32 %v63, %v417
    %v419 = vand.u32 %v418, 4294901760
    %v420 = vsub.f32 %v418, %v419
    %v421 = vand.u32 %v420, 4294901760
    %422 = vmatpush2.msra.mxu0 %v421
    %423 = vmatprep.subr.mxu0 0.0
    %v424 = vand.u32 %v62, 4294901760
    %v425 = vsub.f32 %v62, %v424
    %v426 = vand.u32 %v425, 4294901760
    %v427 = vsub.f32 %v425, %v426
    %v428 = vand.u32 %v427, 4294901760
    %429 = vmatpush2.msra.mxu0 %v428
    %v430 = vand.u32 %v43, 4294901760
    %431 = vmatprep.mubr.f32.mxu0 %v430
    %v432 = vand.u32 %v45, 4294901760
    %433 = vmatmul.mubr.f32.gmra.mxu0 %v432
    %v434 = vpop.f32.mrf.mxu0
    %v435 = vadd.f32 %v203, %v434
    %v436 = vpop.f32.mrf.mxu0
    %437 = vdwg.mxu0
    %438 = vmatprep.subr.mxu0 0.0
    %v439 = vand.u32 %v61, 4294901760
    %v440 = vsub.f32 %v61, %v439
    %441 = vmatpush1.msra.mxu0 %v440
    %442 = vmatprep.subr.mxu0 0.0
    %v443 = vand.u32 %v60, 4294901760
    %v444 = vsub.f32 %v60, %v443
    %445 = vmatpush1.msra.mxu0 %v444
    %446 = vmatprep.subr.mxu0 0.0
    %v447 = vand.u32 %v59, 4294901760
    %v448 = vsub.f32 %v59, %v447
    %449 = vmatpush1.msra.mxu0 %v448
    %450 = vmatprep.subr.mxu0 0.0
    %v451 = vand.u32 %v58, 4294901760
    %v452 = vsub.f32 %v58, %v451
    %453 = vmatpush1.msra.mxu0 %v452
    %454 = vmatprep.subr.mxu0 0.0
    %v455 = vand.u32 %v57, 4294901760
    %v456 = vsub.f32 %v57, %v455
    %457 = vmatpush1.msra.mxu0 %v456
    %458 = vmatprep.subr.mxu0 0.0
    %v459 = vand.u32 %v56, 4294901760
    %v460 = vsub.f32 %v56, %v459
    %461 = vmatpush1.msra.mxu0 %v460
    %462 = vmatprep.subr.mxu0 0.0
    %v463 = vand.u32 %v55, 4294901760
    %v464 = vsub.f32 %v55, %v463
    %465 = vmatpush1.msra.mxu0 %v464
    %466 = vmatprep.subr.mxu0 0.0
    %v467 = vand.u32 %v54, 4294901760
    %v468 = vsub.f32 %v54, %v467
    %469 = vmatpush1.msra.mxu0 %v468
    %470 = vmatprep.subr.mxu0 0.0
    %v471 = vand.u32 %v53, 4294901760
    %v472 = vsub.f32 %v53, %v471
    %473 = vmatpush1.msra.mxu0 %v472
    %474 = vmatprep.subr.mxu0 0.0
    %v475 = vand.u32 %v52, 4294901760
    %v476 = vsub.f32 %v52, %v475
    %477 = vmatpush1.msra.mxu0 %v476
    %478 = vmatprep.subr.mxu0 0.0
    %v479 = vand.u32 %v51, 4294901760
    %v480 = vsub.f32 %v51, %v479
    %481 = vmatpush1.msra.mxu0 %v480
    %482 = vmatprep.subr.mxu0 0.0
    %v483 = vand.u32 %v50, 4294901760
    %v484 = vsub.f32 %v50, %v483
    %485 = vmatpush1.msra.mxu0 %v484
    %486 = vmatprep.subr.mxu0 0.0
    %v487 = vand.u32 %v49, 4294901760
    %v488 = vsub.f32 %v49, %v487
    %489 = vmatpush1.msra.mxu0 %v488
    %490 = vmatprep.subr.mxu0 0.0
    %v491 = vand.u32 %v48, 4294901760
    %v492 = vsub.f32 %v48, %v491
    %493 = vmatpush1.msra.mxu0 %v492
    %494 = vmatprep.subr.mxu0 0.0
    %v495 = vand.u32 %v47, 4294901760
    %v496 = vsub.f32 %v47, %v495
    %497 = vmatpush1.msra.mxu0 %v496
    %498 = vmatprep.subr.mxu0 0.0
    %v499 = vand.u32 %v46, 4294901760
    %v500 = vsub.f32 %v46, %v499
    %501 = vmatpush1.msra.mxu0 %v500
    %502 = vmatprep.subr.mxu0 0.0
    %v503 = vand.u32 %v77, 4294901760
    %v504 = vsub.f32 %v77, %v503
    %505 = vmatpush2.msra.mxu0 %v504
    %506 = vmatprep.subr.mxu0 0.0
    %v507 = vand.u32 %v76, 4294901760
    %v508 = vsub.f32 %v76, %v507
    %509 = vmatpush2.msra.mxu0 %v508
    %510 = vmatprep.subr.mxu0 0.0
    %v511 = vand.u32 %v75, 4294901760
    %v512 = vsub.f32 %v75, %v511
    %513 = vmatpush2.msra.mxu0 %v512
    %514 = vmatprep.subr.mxu0 0.0
    %v515 = vand.u32 %v74, 4294901760
    %v516 = vsub.f32 %v74, %v515
    %517 = vmatpush2.msra.mxu0 %v516
    %518 = vmatprep.subr.mxu0 0.0
    %v519 = vand.u32 %v73, 4294901760
    %v520 = vsub.f32 %v73, %v519
    %521 = vmatpush2.msra.mxu0 %v520
    %522 = vmatprep.subr.mxu0 0.0
    %v523 = vand.u32 %v72, 4294901760
    %v524 = vsub.f32 %v72, %v523
    %525 = vmatpush2.msra.mxu0 %v524
    %526 = vmatprep.subr.mxu0 0.0
    %v527 = vand.u32 %v71, 4294901760
    %v528 = vsub.f32 %v71, %v527
    %529 = vmatpush2.msra.mxu0 %v528
    %530 = vmatprep.subr.mxu0 0.0
    %v531 = vand.u32 %v70, 4294901760
    %v532 = vsub.f32 %v70, %v531
    %533 = vmatpush2.msra.mxu0 %v532
    %534 = vmatprep.subr.mxu0 0.0
    %v535 = vand.u32 %v69, 4294901760
    %v536 = vsub.f32 %v69, %v535
    %537 = vmatpush2.msra.mxu0 %v536
    %538 = vmatprep.subr.mxu0 0.0
    %v539 = vand.u32 %v68, 4294901760
    %v540 = vsub.f32 %v68, %v539
    %541 = vmatpush2.msra.mxu0 %v540
    %542 = vmatprep.subr.mxu0 0.0
    %v543 = vand.u32 %v67, 4294901760
    %v544 = vsub.f32 %v67, %v543
    %545 = vmatpush2.msra.mxu0 %v544
    %546 = vmatprep.subr.mxu0 0.0
    %v547 = vand.u32 %v66, 4294901760
    %v548 = vsub.f32 %v66, %v547
    %549 = vmatpush2.msra.mxu0 %v548
    %550 = vmatprep.subr.mxu0 0.0
    %v551 = vand.u32 %v65, 4294901760
    %v552 = vsub.f32 %v65, %v551
    %553 = vmatpush2.msra.mxu0 %v552
    %554 = vmatprep.subr.mxu0 0.0
    %v555 = vand.u32 %v64, 4294901760
    %v556 = vsub.f32 %v64, %v555
    %557 = vmatpush2.msra.mxu0 %v556
    %558 = vmatprep.subr.mxu0 0.0
    %v559 = vand.u32 %v63, 4294901760
    %v560 = vsub.f32 %v63, %v559
    %561 = vmatpush2.msra.mxu0 %v560
    %562 = vmatprep.subr.mxu0 0.0
    %v563 = vand.u32 %v62, 4294901760
    %v564 = vsub.f32 %v62, %v563
    %565 = vmatpush2.msra.mxu0 %v564
    %v566 = vand.u32 %v43, 4294901760
    %v567 = vsub.f32 %v43, %v566
    %568 = vmatprep.mubr.f32.mxu0 %v567
    %v569 = vand.u32 %v45, 4294901760
    %v570 = vsub.f32 %v45, %v569
    %571 = vmatmul.mubr.f32.gmra.mxu0 %v570
    %v572 = vpop.f32.mrf.mxu0
    %v573 = vadd.f32 %v435, %v572
    %v574 = vpop.f32.mrf.mxu0
    %575 = vdwg.mxu0
    %576 = vmatprep.subr.mxu0 0.0
    %v577 = vand.u32 %v61, 4294901760
    %578 = vmatpush1.msra.mxu0 %v577
    %579 = vmatprep.subr.mxu0 0.0
    %v580 = vand.u32 %v60, 4294901760
    %581 = vmatpush1.msra.mxu0 %v580
    %582 = vmatprep.subr.mxu0 0.0
    %v583 = vand.u32 %v59, 4294901760
    %584 = vmatpush1.msra.mxu0 %v583
    %585 = vmatprep.subr.mxu0 0.0
    %v586 = vand.u32 %v58, 4294901760
    %587 = vmatpush1.msra.mxu0 %v586
    %588 = vmatprep.subr.mxu0 0.0
    %v589 = vand.u32 %v57, 4294901760
    %590 = vmatpush1.msra.mxu0 %v589
    %591 = vmatprep.subr.mxu0 0.0
    %v592 = vand.u32 %v56, 4294901760
    %593 = vmatpush1.msra.mxu0 %v592
    %594 = vmatprep.subr.mxu0 0.0
    %v595 = vand.u32 %v55, 4294901760
    %596 = vmatpush1.msra.mxu0 %v595
    %597 = vmatprep.subr.mxu0 0.0
    %v598 = vand.u32 %v54, 4294901760
    %599 = vmatpush1.msra.mxu0 %v598
    %600 = vmatprep.subr.mxu0 0.0
    %v601 = vand.u32 %v53, 4294901760
    %602 = vmatpush1.msra.mxu0 %v601
    %603 = vmatprep.subr.mxu0 0.0
    %v604 = vand.u32 %v52, 4294901760
    %605 = vmatpush1.msra.mxu0 %v604
    %606 = vmatprep.subr.mxu0 0.0
    %v607 = vand.u32 %v51, 4294901760
    %608 = vmatpush1.msra.mxu0 %v607
    %609 = vmatprep.subr.mxu0 0.0
    %v610 = vand.u32 %v50, 4294901760
    %611 = vmatpush1.msra.mxu0 %v610
    %612 = vmatprep.subr.mxu0 0.0
    %v613 = vand.u32 %v49, 4294901760
    %614 = vmatpush1.msra.mxu0 %v613
    %615 = vmatprep.subr.mxu0 0.0
    %v616 = vand.u32 %v48, 4294901760
    %617 = vmatpush1.msra.mxu0 %v616
    %618 = vmatprep.subr.mxu0 0.0
    %v619 = vand.u32 %v47, 4294901760
    %620 = vmatpush1.msra.mxu0 %v619
    %621 = vmatprep.subr.mxu0 0.0
    %v622 = vand.u32 %v46, 4294901760
    %623 = vmatpush1.msra.mxu0 %v622
    %624 = vmatprep.subr.mxu0 0.0
    %v625 = vand.u32 %v77, 4294901760
    %626 = vmatpush2.msra.mxu0 %v625
    %627 = vmatprep.subr.mxu0 0.0
    %v628 = vand.u32 %v76, 4294901760
    %629 = vmatpush2.msra.mxu0 %v628
    %630 = vmatprep.subr.mxu0 0.0
    %v631 = vand.u32 %v75, 4294901760
    %632 = vmatpush2.msra.mxu0 %v631
    %633 = vmatprep.subr.mxu0 0.0
    %v634 = vand.u32 %v74, 4294901760
    %635 = vmatpush2.msra.mxu0 %v634
    %636 = vmatprep.subr.mxu0 0.0
    %v637 = vand.u32 %v73, 4294901760
    %638 = vmatpush2.msra.mxu0 %v637
    %639 = vmatprep.subr.mxu0 0.0
    %v640 = vand.u32 %v72, 4294901760
    %641 = vmatpush2.msra.mxu0 %v640
    %642 = vmatprep.subr.mxu0 0.0
    %v643 = vand.u32 %v71, 4294901760
    %644 = vmatpush2.msra.mxu0 %v643
    %645 = vmatprep.subr.mxu0 0.0
    %v646 = vand.u32 %v70, 4294901760
    %647 = vmatpush2.msra.mxu0 %v646
    %648 = vmatprep.subr.mxu0 0.0
    %v649 = vand.u32 %v69, 4294901760
    %650 = vmatpush2.msra.mxu0 %v649
    %651 = vmatprep.subr.mxu0 0.0
    %v652 = vand.u32 %v68, 4294901760
    %653 = vmatpush2.msra.mxu0 %v652
    %654 = vmatprep.subr.mxu0 0.0
    %v655 = vand.u32 %v67, 4294901760
    %656 = vmatpush2.msra.mxu0 %v655
    %657 = vmatprep.subr.mxu0 0.0
    %v658 = vand.u32 %v66, 4294901760
    %659 = vmatpush2.msra.mxu0 %v658
    %660 = vmatprep.subr.mxu0 0.0
    %v661 = vand.u32 %v65, 4294901760
    %662 = vmatpush2.msra.mxu0 %v661
    %663 = vmatprep.subr.mxu0 0.0
    %v664 = vand.u32 %v64, 4294901760
    %665 = vmatpush2.msra.mxu0 %v664
    %666 = vmatprep.subr.mxu0 0.0
    %v667 = vand.u32 %v63, 4294901760
    %668 = vmatpush2.msra.mxu0 %v667
    %669 = vmatprep.subr.mxu0 0.0
    %v670 = vand.u32 %v62, 4294901760
    %671 = vmatpush2.msra.mxu0 %v670
    %v672 = vand.u32 %v43, 4294901760
    %v673 = vsub.f32 %v43, %v672
    %v674 = vand.u32 %v673, 4294901760
    %675 = vmatprep.mubr.f32.mxu0 %v674
    %v676 = vand.u32 %v45, 4294901760
    %v677 = vsub.f32 %v45, %v676
    %v678 = vand.u32 %v677, 4294901760
    %679 = vmatmul.mubr.f32.gmra.mxu0 %v678
    %v680 = vpop.f32.mrf.mxu0
    %v681 = vadd.f32 %v573, %v680
    %v682 = vpop.f32.mrf.mxu0
    %683 = vdwg.mxu0
    %684 = vmatprep.subr.mxu0 0.0
    %v685 = vand.u32 %v61, 4294901760
    %v686 = vsub.f32 %v61, %v685
    %v687 = vand.u32 %v686, 4294901760
    %688 = vmatpush1.msra.mxu0 %v687
    %689 = vmatprep.subr.mxu0 0.0
    %v690 = vand.u32 %v60, 4294901760
    %v691 = vsub.f32 %v60, %v690
    %v692 = vand.u32 %v691, 4294901760
    %693 = vmatpush1.msra.mxu0 %v692
    %694 = vmatprep.subr.mxu0 0.0
    %v695 = vand.u32 %v59, 4294901760
    %v696 = vsub.f32 %v59, %v695
    %v697 = vand.u32 %v696, 4294901760
    %698 = vmatpush1.msra.mxu0 %v697
    %699 = vmatprep.subr.mxu0 0.0
    %v700 = vand.u32 %v58, 4294901760
    %v701 = vsub.f32 %v58, %v700
    %v702 = vand.u32 %v701, 4294901760
    %703 = vmatpush1.msra.mxu0 %v702
    %704 = vmatprep.subr.mxu0 0.0
    %v705 = vand.u32 %v57, 4294901760
    %v706 = vsub.f32 %v57, %v705
    %v707 = vand.u32 %v706, 4294901760
    %708 = vmatpush1.msra.mxu0 %v707
    %709 = vmatprep.subr.mxu0 0.0
    %v710 = vand.u32 %v56, 4294901760
    %v711 = vsub.f32 %v56, %v710
    %v712 = vand.u32 %v711, 4294901760
    %713 = vmatpush1.msra.mxu0 %v712
    %714 = vmatprep.subr.mxu0 0.0
    %v715 = vand.u32 %v55, 4294901760
    %v716 = vsub.f32 %v55, %v715
    %v717 = vand.u32 %v716, 4294901760
    %718 = vmatpush1.msra.mxu0 %v717
    %719 = vmatprep.subr.mxu0 0.0
    %v720 = vand.u32 %v54, 4294901760
    %v721 = vsub.f32 %v54, %v720
    %v722 = vand.u32 %v721, 4294901760
    %723 = vmatpush1.msra.mxu0 %v722
    %724 = vmatprep.subr.mxu0 0.0
    %v725 = vand.u32 %v53, 4294901760
    %v726 = vsub.f32 %v53, %v725
    %v727 = vand.u32 %v726, 4294901760
    %728 = vmatpush1.msra.mxu0 %v727
    %729 = vmatprep.subr.mxu0 0.0
    %v730 = vand.u32 %v52, 4294901760
    %v731 = vsub.f32 %v52, %v730
    %v732 = vand.u32 %v731, 4294901760
    %733 = vmatpush1.msra.mxu0 %v732
    %734 = vmatprep.subr.mxu0 0.0
    %v735 = vand.u32 %v51, 4294901760
    %v736 = vsub.f32 %v51, %v735
    %v737 = vand.u32 %v736, 4294901760
    %738 = vmatpush1.msra.mxu0 %v737
    %739 = vmatprep.subr.mxu0 0.0
    %v740 = vand.u32 %v50, 4294901760
    %v741 = vsub.f32 %v50, %v740
    %v742 = vand.u32 %v741, 4294901760
    %743 = vmatpush1.msra.mxu0 %v742
    %744 = vmatprep.subr.mxu0 0.0
    %v745 = vand.u32 %v49, 4294901760
    %v746 = vsub.f32 %v49, %v745
    %v747 = vand.u32 %v746, 4294901760
    %748 = vmatpush1.msra.mxu0 %v747
    %749 = vmatprep.subr.mxu0 0.0
    %v750 = vand.u32 %v48, 4294901760
    %v751 = vsub.f32 %v48, %v750
    %v752 = vand.u32 %v751, 4294901760
    %753 = vmatpush1.msra.mxu0 %v752
    %754 = vmatprep.subr.mxu0 0.0
    %v755 = vand.u32 %v47, 4294901760
    %v756 = vsub.f32 %v47, %v755
    %v757 = vand.u32 %v756, 4294901760
    %758 = vmatpush1.msra.mxu0 %v757
    %759 = vmatprep.subr.mxu0 0.0
    %v760 = vand.u32 %v46, 4294901760
    %v761 = vsub.f32 %v46, %v760
    %v762 = vand.u32 %v761, 4294901760
    %763 = vmatpush1.msra.mxu0 %v762
    %764 = vmatprep.subr.mxu0 0.0
    %v765 = vand.u32 %v77, 4294901760
    %v766 = vsub.f32 %v77, %v765
    %v767 = vand.u32 %v766, 4294901760
    %768 = vmatpush2.msra.mxu0 %v767
    %769 = vmatprep.subr.mxu0 0.0
    %v770 = vand.u32 %v76, 4294901760
    %v771 = vsub.f32 %v76, %v770
    %v772 = vand.u32 %v771, 4294901760
    %773 = vmatpush2.msra.mxu0 %v772
    %774 = vmatprep.subr.mxu0 0.0
    %v775 = vand.u32 %v75, 4294901760
    %v776 = vsub.f32 %v75, %v775
    %v777 = vand.u32 %v776, 4294901760
    %778 = vmatpush2.msra.mxu0 %v777
    %779 = vmatprep.subr.mxu0 0.0
    %v780 = vand.u32 %v74, 4294901760
    %v781 = vsub.f32 %v74, %v780
    %v782 = vand.u32 %v781, 4294901760
    %783 = vmatpush2.msra.mxu0 %v782
    %784 = vmatprep.subr.mxu0 0.0
    %v785 = vand.u32 %v73, 4294901760
    %v786 = vsub.f32 %v73, %v785
    %v787 = vand.u32 %v786, 4294901760
    %788 = vmatpush2.msra.mxu0 %v787
    %789 = vmatprep.subr.mxu0 0.0
    %v790 = vand.u32 %v72, 4294901760
    %v791 = vsub.f32 %v72, %v790
    %v792 = vand.u32 %v791, 4294901760
    %793 = vmatpush2.msra.mxu0 %v792
    %794 = vmatprep.subr.mxu0 0.0
    %v795 = vand.u32 %v71, 4294901760
    %v796 = vsub.f32 %v71, %v795
    %v797 = vand.u32 %v796, 4294901760
    %798 = vmatpush2.msra.mxu0 %v797
    %799 = vmatprep.subr.mxu0 0.0
    %v800 = vand.u32 %v70, 4294901760
    %v801 = vsub.f32 %v70, %v800
    %v802 = vand.u32 %v801, 4294901760
    %803 = vmatpush2.msra.mxu0 %v802
    %804 = vmatprep.subr.mxu0 0.0
    %v805 = vand.u32 %v69, 4294901760
    %v806 = vsub.f32 %v69, %v805
    %v807 = vand.u32 %v806, 4294901760
    %808 = vmatpush2.msra.mxu0 %v807
    %809 = vmatprep.subr.mxu0 0.0
    %v810 = vand.u32 %v68, 4294901760
    %v811 = vsub.f32 %v68, %v810
    %v812 = vand.u32 %v811, 4294901760
    %813 = vmatpush2.msra.mxu0 %v812
    %814 = vmatprep.subr.mxu0 0.0
    %v815 = vand.u32 %v67, 4294901760
    %v816 = vsub.f32 %v67, %v815
    %v817 = vand.u32 %v816, 4294901760
    %818 = vmatpush2.msra.mxu0 %v817
    %819 = vmatprep.subr.mxu0 0.0
    %v820 = vand.u32 %v66, 4294901760
    %v821 = vsub.f32 %v66, %v820
    %v822 = vand.u32 %v821, 4294901760
    %823 = vmatpush2.msra.mxu0 %v822
    %824 = vmatprep.subr.mxu0 0.0
    %v825 = vand.u32 %v65, 4294901760
    %v826 = vsub.f32 %v65, %v825
    %v827 = vand.u32 %v826, 4294901760
    %828 = vmatpush2.msra.mxu0 %v827
    %829 = vmatprep.subr.mxu0 0.0
    %v830 = vand.u32 %v64, 4294901760
    %v831 = vsub.f32 %v64, %v830
    %v832 = vand.u32 %v831, 4294901760
    %833 = vmatpush2.msra.mxu0 %v832
    %834 = vmatprep.subr.mxu0 0.0
    %v835 = vand.u32 %v63, 4294901760
    %v836 = vsub.f32 %v63, %v835
    %v837 = vand.u32 %v836, 4294901760
    %838 = vmatpush2.msra.mxu0 %v837
    %839 = vmatprep.subr.mxu0 0.0
    %v840 = vand.u32 %v62, 4294901760
    %v841 = vsub.f32 %v62, %v840
    %v842 = vand.u32 %v841, 4294901760
    %843 = vmatpush2.msra.mxu0 %v842
    %v844 = vand.u32 %v43, 4294901760
    %845 = vmatprep.mubr.f32.mxu0 %v844
    %v846 = vand.u32 %v45, 4294901760
    %847 = vmatmul.mubr.f32.gmra.mxu0 %v846
    %v848 = vpop.f32.mrf.mxu0
    %v849 = vadd.f32 %v681, %v848
    %v850 = vpop.f32.mrf.mxu0
    %851 = vdwg.mxu0
    %852 = vmatprep.subr.mxu0 0.0
    %v853 = vand.u32 %v61, 4294901760
    %854 = vmatpush1.msra.mxu0 %v853
    %855 = vmatprep.subr.mxu0 0.0
    %v856 = vand.u32 %v60, 4294901760
    %857 = vmatpush1.msra.mxu0 %v856
    %858 = vmatprep.subr.mxu0 0.0
    %v859 = vand.u32 %v59, 4294901760
    %860 = vmatpush1.msra.mxu0 %v859
    %861 = vmatprep.subr.mxu0 0.0
    %v862 = vand.u32 %v58, 4294901760
    %863 = vmatpush1.msra.mxu0 %v862
    %864 = vmatprep.subr.mxu0 0.0
    %v865 = vand.u32 %v57, 4294901760
    %866 = vmatpush1.msra.mxu0 %v865
    %867 = vmatprep.subr.mxu0 0.0
    %v868 = vand.u32 %v56, 4294901760
    %869 = vmatpush1.msra.mxu0 %v868
    %870 = vmatprep.subr.mxu0 0.0
    %v871 = vand.u32 %v55, 4294901760
    %872 = vmatpush1.msra.mxu0 %v871
    %873 = vmatprep.subr.mxu0 0.0
    %v874 = vand.u32 %v54, 4294901760
    %875 = vmatpush1.msra.mxu0 %v874
    %876 = vmatprep.subr.mxu0 0.0
    %v877 = vand.u32 %v53, 4294901760
    %878 = vmatpush1.msra.mxu0 %v877
    %879 = vmatprep.subr.mxu0 0.0
    %v880 = vand.u32 %v52, 4294901760
    %881 = vmatpush1.msra.mxu0 %v880
    %882 = vmatprep.subr.mxu0 0.0
    %v883 = vand.u32 %v51, 4294901760
    %884 = vmatpush1.msra.mxu0 %v883
    %885 = vmatprep.subr.mxu0 0.0
    %v886 = vand.u32 %v50, 4294901760
    %887 = vmatpush1.msra.mxu0 %v886
    %888 = vmatprep.subr.mxu0 0.0
    %v889 = vand.u32 %v49, 4294901760
    %890 = vmatpush1.msra.mxu0 %v889
    %891 = vmatprep.subr.mxu0 0.0
    %v892 = vand.u32 %v48, 4294901760
    %893 = vmatpush1.msra.mxu0 %v892
    %894 = vmatprep.subr.mxu0 0.0
    %v895 = vand.u32 %v47, 4294901760
    %896 = vmatpush1.msra.mxu0 %v895
    %897 = vmatprep.subr.mxu0 0.0
    %v898 = vand.u32 %v46, 4294901760
    %899 = vmatpush1.msra.mxu0 %v898
    %900 = vmatprep.subr.mxu0 0.0
    %v901 = vand.u32 %v77, 4294901760
    %902 = vmatpush2.msra.mxu0 %v901
    %903 = vmatprep.subr.mxu0 0.0
    %v904 = vand.u32 %v76, 4294901760
    %905 = vmatpush2.msra.mxu0 %v904
    %906 = vmatprep.subr.mxu0 0.0
    %v907 = vand.u32 %v75, 4294901760
    %908 = vmatpush2.msra.mxu0 %v907
    %909 = vmatprep.subr.mxu0 0.0
    %v910 = vand.u32 %v74, 4294901760
    %911 = vmatpush2.msra.mxu0 %v910
    %912 = vmatprep.subr.mxu0 0.0
    %v913 = vand.u32 %v73, 4294901760
    %914 = vmatpush2.msra.mxu0 %v913
    %915 = vmatprep.subr.mxu0 0.0
    %v916 = vand.u32 %v72, 4294901760
    %917 = vmatpush2.msra.mxu0 %v916
    %918 = vmatprep.subr.mxu0 0.0
    %v919 = vand.u32 %v71, 4294901760
    %920 = vmatpush2.msra.mxu0 %v919
    %921 = vmatprep.subr.mxu0 0.0
    %v922 = vand.u32 %v70, 4294901760
    %923 = vmatpush2.msra.mxu0 %v922
    %924 = vmatprep.subr.mxu0 0.0
    %v925 = vand.u32 %v69, 4294901760
    %926 = vmatpush2.msra.mxu0 %v925
    %927 = vmatprep.subr.mxu0 0.0
    %v928 = vand.u32 %v68, 4294901760
    %929 = vmatpush2.msra.mxu0 %v928
    %930 = vmatprep.subr.mxu0 0.0
    %v931 = vand.u32 %v67, 4294901760
    %932 = vmatpush2.msra.mxu0 %v931
    %933 = vmatprep.subr.mxu0 0.0
    %v934 = vand.u32 %v66, 4294901760
    %935 = vmatpush2.msra.mxu0 %v934
    %936 = vmatprep.subr.mxu0 0.0
    %v937 = vand.u32 %v65, 4294901760
    %938 = vmatpush2.msra.mxu0 %v937
    %939 = vmatprep.subr.mxu0 0.0
    %v940 = vand.u32 %v64, 4294901760
    %941 = vmatpush2.msra.mxu0 %v940
    %942 = vmatprep.subr.mxu0 0.0
    %v943 = vand.u32 %v63, 4294901760
    %944 = vmatpush2.msra.mxu0 %v943
    %945 = vmatprep.subr.mxu0 0.0
    %v946 = vand.u32 %v62, 4294901760
    %947 = vmatpush2.msra.mxu0 %v946
    %v948 = vand.u32 %v43, 4294901760
    %949 = vmatprep.mubr.f32.mxu0 %v948
    %v950 = vand.u32 %v45, 4294901760
    %951 = vmatmul.mubr.f32.gmra.mxu0 %v950
    %v952 = vpop.f32.mrf.mxu0
    %v953 = vadd.f32 %v849, %v952
    %v954 = vpop.f32.mrf.mxu0
    %955 = vdwg.mxu0
    %956 = vmatprep.subr.mxu0 0.0
    %v957 = vand.u32 %v93, 4294901760
    %958 = vmatpush1.msra.mxu0 %v957
    %959 = vmatprep.subr.mxu0 0.0
    %v960 = vand.u32 %v92, 4294901760
    %961 = vmatpush1.msra.mxu0 %v960
    %962 = vmatprep.subr.mxu0 0.0
    %v963 = vand.u32 %v91, 4294901760
    %964 = vmatpush1.msra.mxu0 %v963
    %965 = vmatprep.subr.mxu0 0.0
    %v966 = vand.u32 %v90, 4294901760
    %967 = vmatpush1.msra.mxu0 %v966
    %968 = vmatprep.subr.mxu0 0.0
    %v969 = vand.u32 %v89, 4294901760
    %970 = vmatpush1.msra.mxu0 %v969
    %971 = vmatprep.subr.mxu0 0.0
    %v972 = vand.u32 %v88, 4294901760
    %973 = vmatpush1.msra.mxu0 %v972
    %974 = vmatprep.subr.mxu0 0.0
    %v975 = vand.u32 %v87, 4294901760
    %976 = vmatpush1.msra.mxu0 %v975
    %977 = vmatprep.subr.mxu0 0.0
    %v978 = vand.u32 %v86, 4294901760
    %979 = vmatpush1.msra.mxu0 %v978
    %980 = vmatprep.subr.mxu0 0.0
    %v981 = vand.u32 %v85, 4294901760
    %982 = vmatpush1.msra.mxu0 %v981
    %983 = vmatprep.subr.mxu0 0.0
    %v984 = vand.u32 %v84, 4294901760
    %985 = vmatpush1.msra.mxu0 %v984
    %986 = vmatprep.subr.mxu0 0.0
    %v987 = vand.u32 %v83, 4294901760
    %988 = vmatpush1.msra.mxu0 %v987
    %989 = vmatprep.subr.mxu0 0.0
    %v990 = vand.u32 %v82, 4294901760
    %991 = vmatpush1.msra.mxu0 %v990
    %992 = vmatprep.subr.mxu0 0.0
    %v993 = vand.u32 %v81, 4294901760
    %994 = vmatpush1.msra.mxu0 %v993
    %995 = vmatprep.subr.mxu0 0.0
    %v996 = vand.u32 %v80, 4294901760
    %997 = vmatpush1.msra.mxu0 %v996
    %998 = vmatprep.subr.mxu0 0.0
    %v999 = vand.u32 %v79, 4294901760
    %1000 = vmatpush1.msra.mxu0 %v999
    %1001 = vmatprep.subr.mxu0 0.0
    %v1002 = vand.u32 %v78, 4294901760
    %1003 = vmatpush1.msra.mxu0 %v1002
    %1004 = vmatprep.subr.mxu0 0.0
    %1005 = vmatpush2.msra.mxu0 0.0
    %1006 = vmatprep.subr.mxu0 0.0
    %1007 = vmatpush2.msra.mxu0 0.0
    %1008 = vmatprep.subr.mxu0 0.0
    %1009 = vmatpush2.msra.mxu0 0.0
    %1010 = vmatprep.subr.mxu0 0.0
    %1011 = vmatpush2.msra.mxu0 0.0
    %1012 = vmatprep.subr.mxu0 0.0
    %1013 = vmatpush2.msra.mxu0 0.0
    %1014 = vmatprep.subr.mxu0 0.0
    %1015 = vmatpush2.msra.mxu0 0.0
    %1016 = vmatprep.subr.mxu0 0.0
    %1017 = vmatpush2.msra.mxu0 0.0
    %1018 = vmatprep.subr.mxu0 0.0
    %1019 = vmatpush2.msra.mxu0 0.0
    %1020 = vmatprep.subr.mxu0 0.0
    %1021 = vmatpush2.msra.mxu0 0.0
    %1022 = vmatprep.subr.mxu0 0.0
    %1023 = vmatpush2.msra.mxu0 0.0
    %1024 = vmatprep.subr.mxu0 0.0
    %1025 = vmatpush2.msra.mxu0 0.0
    %1026 = vmatprep.subr.mxu0 0.0
    %1027 = vmatpush2.msra.mxu0 0.0
    %1028 = vmatprep.subr.mxu0 0.0
    %1029 = vmatpush2.msra.mxu0 0.0
    %1030 = vmatprep.subr.mxu0 0.0
    %1031 = vmatpush2.msra.mxu0 0.0
    %1032 = vmatprep.subr.mxu0 0.0
    %1033 = vmatpush2.msra.mxu0 0.0
    %1034 = vmatprep.subr.mxu0 0.0
    %1035 = vmatpush2.msra.mxu0 0.0
    %1036 = vmatprep.mubr.f32.mxu0 0.0
    %v1037 = vand.u32 %v42, 4294901760
    %v1038 = vsub.f32 %v42, %v1037
    %v1039 = vand.u32 %v1038, 4294901760
    %v1040 = vsub.f32 %v1038, %v1039
    %v1041 = vand.u32 %v1040, 4294901760
    %1042 = vmatmul.mubr.f32.gmra.mxu0 %v1041
    %v1043 = vpop.f32.mrf.mxu0
    %v1044 = vadd.f32 %v953, %v1043
    %v1045 = vpop.f32.mrf.mxu0
    %1046 = vdwg.mxu0
    %1047 = vmatprep.subr.mxu0 0.0
    %v1048 = vand.u32 %v93, 4294901760
    %v1049 = vsub.f32 %v93, %v1048
    %v1050 = vand.u32 %v1049, 4294901760
    %v1051 = vsub.f32 %v1049, %v1050
    %v1052 = vand.u32 %v1051, 4294901760
    %1053 = vmatpush1.msra.mxu0 %v1052
    %1054 = vmatprep.subr.mxu0 0.0
    %v1055 = vand.u32 %v92, 4294901760
    %v1056 = vsub.f32 %v92, %v1055
    %v1057 = vand.u32 %v1056, 4294901760
    %v1058 = vsub.f32 %v1056, %v1057
    %v1059 = vand.u32 %v1058, 4294901760
    %1060 = vmatpush1.msra.mxu0 %v1059
    %1061 = vmatprep.subr.mxu0 0.0
    %v1062 = vand.u32 %v91, 4294901760
    %v1063 = vsub.f32 %v91, %v1062
    %v1064 = vand.u32 %v1063, 4294901760
    %v1065 = vsub.f32 %v1063, %v1064
    %v1066 = vand.u32 %v1065, 4294901760
    %1067 = vmatpush1.msra.mxu0 %v1066
    %1068 = vmatprep.subr.mxu0 0.0
    %v1069 = vand.u32 %v90, 4294901760
    %v1070 = vsub.f32 %v90, %v1069
    %v1071 = vand.u32 %v1070, 4294901760
    %v1072 = vsub.f32 %v1070, %v1071
    %v1073 = vand.u32 %v1072, 4294901760
    %1074 = vmatpush1.msra.mxu0 %v1073
    %1075 = vmatprep.subr.mxu0 0.0
    %v1076 = vand.u32 %v89, 4294901760
    %v1077 = vsub.f32 %v89, %v1076
    %v1078 = vand.u32 %v1077, 4294901760
    %v1079 = vsub.f32 %v1077, %v1078
    %v1080 = vand.u32 %v1079, 4294901760
    %1081 = vmatpush1.msra.mxu0 %v1080
    %1082 = vmatprep.subr.mxu0 0.0
    %v1083 = vand.u32 %v88, 4294901760
    %v1084 = vsub.f32 %v88, %v1083
    %v1085 = vand.u32 %v1084, 4294901760
    %v1086 = vsub.f32 %v1084, %v1085
    %v1087 = vand.u32 %v1086, 4294901760
    %1088 = vmatpush1.msra.mxu0 %v1087
    %1089 = vmatprep.subr.mxu0 0.0
    %v1090 = vand.u32 %v87, 4294901760
    %v1091 = vsub.f32 %v87, %v1090
    %v1092 = vand.u32 %v1091, 4294901760
    %v1093 = vsub.f32 %v1091, %v1092
    %v1094 = vand.u32 %v1093, 4294901760
    %1095 = vmatpush1.msra.mxu0 %v1094
    %1096 = vmatprep.subr.mxu0 0.0
    %v1097 = vand.u32 %v86, 4294901760
    %v1098 = vsub.f32 %v86, %v1097
    %v1099 = vand.u32 %v1098, 4294901760
    %v1100 = vsub.f32 %v1098, %v1099
    %v1101 = vand.u32 %v1100, 4294901760
    %1102 = vmatpush1.msra.mxu0 %v1101
    %1103 = vmatprep.subr.mxu0 0.0
    %v1104 = vand.u32 %v85, 4294901760
    %v1105 = vsub.f32 %v85, %v1104
    %v1106 = vand.u32 %v1105, 4294901760
    %v1107 = vsub.f32 %v1105, %v1106
    %v1108 = vand.u32 %v1107, 4294901760
    %1109 = vmatpush1.msra.mxu0 %v1108
    %1110 = vmatprep.subr.mxu0 0.0
    %v1111 = vand.u32 %v84, 4294901760
    %v1112 = vsub.f32 %v84, %v1111
    %v1113 = vand.u32 %v1112, 4294901760
    %v1114 = vsub.f32 %v1112, %v1113
    %v1115 = vand.u32 %v1114, 4294901760
    %1116 = vmatpush1.msra.mxu0 %v1115
    %1117 = vmatprep.subr.mxu0 0.0
    %v1118 = vand.u32 %v83, 4294901760
    %v1119 = vsub.f32 %v83, %v1118
    %v1120 = vand.u32 %v1119, 4294901760
    %v1121 = vsub.f32 %v1119, %v1120
    %v1122 = vand.u32 %v1121, 4294901760
    %1123 = vmatpush1.msra.mxu0 %v1122
    %1124 = vmatprep.subr.mxu0 0.0
    %v1125 = vand.u32 %v82, 4294901760
    %v1126 = vsub.f32 %v82, %v1125
    %v1127 = vand.u32 %v1126, 4294901760
    %v1128 = vsub.f32 %v1126, %v1127
    %v1129 = vand.u32 %v1128, 4294901760
    %1130 = vmatpush1.msra.mxu0 %v1129
    %1131 = vmatprep.subr.mxu0 0.0
    %v1132 = vand.u32 %v81, 4294901760
    %v1133 = vsub.f32 %v81, %v1132
    %v1134 = vand.u32 %v1133, 4294901760
    %v1135 = vsub.f32 %v1133, %v1134
    %v1136 = vand.u32 %v1135, 4294901760
    %1137 = vmatpush1.msra.mxu0 %v1136
    %1138 = vmatprep.subr.mxu0 0.0
    %v1139 = vand.u32 %v80, 4294901760
    %v1140 = vsub.f32 %v80, %v1139
    %v1141 = vand.u32 %v1140, 4294901760
    %v1142 = vsub.f32 %v1140, %v1141
    %v1143 = vand.u32 %v1142, 4294901760
    %1144 = vmatpush1.msra.mxu0 %v1143
    %1145 = vmatprep.subr.mxu0 0.0
    %v1146 = vand.u32 %v79, 4294901760
    %v1147 = vsub.f32 %v79, %v1146
    %v1148 = vand.u32 %v1147, 4294901760
    %v1149 = vsub.f32 %v1147, %v1148
    %v1150 = vand.u32 %v1149, 4294901760
    %1151 = vmatpush1.msra.mxu0 %v1150
    %1152 = vmatprep.subr.mxu0 0.0
    %v1153 = vand.u32 %v78, 4294901760
    %v1154 = vsub.f32 %v78, %v1153
    %v1155 = vand.u32 %v1154, 4294901760
    %v1156 = vsub.f32 %v1154, %v1155
    %v1157 = vand.u32 %v1156, 4294901760
    %1158 = vmatpush1.msra.mxu0 %v1157
    %1159 = vmatprep.subr.mxu0 0.0
    %1160 = vmatpush2.msra.mxu0 0.0
    %1161 = vmatprep.subr.mxu0 0.0
    %1162 = vmatpush2.msra.mxu0 0.0
    %1163 = vmatprep.subr.mxu0 0.0
    %1164 = vmatpush2.msra.mxu0 0.0
    %1165 = vmatprep.subr.mxu0 0.0
    %1166 = vmatpush2.msra.mxu0 0.0
    %1167 = vmatprep.subr.mxu0 0.0
    %1168 = vmatpush2.msra.mxu0 0.0
    %1169 = vmatprep.subr.mxu0 0.0
    %1170 = vmatpush2.msra.mxu0 0.0
    %1171 = vmatprep.subr.mxu0 0.0
    %1172 = vmatpush2.msra.mxu0 0.0
    %1173 = vmatprep.subr.mxu0 0.0
    %1174 = vmatpush2.msra.mxu0 0.0
    %1175 = vmatprep.subr.mxu0 0.0
    %1176 = vmatpush2.msra.mxu0 0.0
    %1177 = vmatprep.subr.mxu0 0.0
    %1178 = vmatpush2.msra.mxu0 0.0
    %1179 = vmatprep.subr.mxu0 0.0
    %1180 = vmatpush2.msra.mxu0 0.0
    %1181 = vmatprep.subr.mxu0 0.0
    %1182 = vmatpush2.msra.mxu0 0.0
    %1183 = vmatprep.subr.mxu0 0.0
    %1184 = vmatpush2.msra.mxu0 0.0
    %1185 = vmatprep.subr.mxu0 0.0
    %1186 = vmatpush2.msra.mxu0 0.0
    %1187 = vmatprep.subr.mxu0 0.0
    %1188 = vmatpush2.msra.mxu0 0.0
    %1189 = vmatprep.subr.mxu0 0.0
    %1190 = vmatpush2.msra.mxu0 0.0
    %1191 = vmatprep.mubr.f32.mxu0 0.0
    %v1192 = vand.u32 %v42, 4294901760
    %1193 = vmatmul.mubr.f32.gmra.mxu0 %v1192
    %v1194 = vpop.f32.mrf.mxu0
    %v1195 = vadd.f32 %v1044, %v1194
    %v1196 = vpop.f32.mrf.mxu0
    %1197 = vdwg.mxu0
    %1198 = vmatprep.subr.mxu0 0.0
    %v1199 = vand.u32 %v93, 4294901760
    %v1200 = vsub.f32 %v93, %v1199
    %1201 = vmatpush1.msra.mxu0 %v1200
    %1202 = vmatprep.subr.mxu0 0.0
    %v1203 = vand.u32 %v92, 4294901760
    %v1204 = vsub.f32 %v92, %v1203
    %1205 = vmatpush1.msra.mxu0 %v1204
    %1206 = vmatprep.subr.mxu0 0.0
    %v1207 = vand.u32 %v91, 4294901760
    %v1208 = vsub.f32 %v91, %v1207
    %1209 = vmatpush1.msra.mxu0 %v1208
    %1210 = vmatprep.subr.mxu0 0.0
    %v1211 = vand.u32 %v90, 4294901760
    %v1212 = vsub.f32 %v90, %v1211
    %1213 = vmatpush1.msra.mxu0 %v1212
    %1214 = vmatprep.subr.mxu0 0.0
    %v1215 = vand.u32 %v89, 4294901760
    %v1216 = vsub.f32 %v89, %v1215
    %1217 = vmatpush1.msra.mxu0 %v1216
    %1218 = vmatprep.subr.mxu0 0.0
    %v1219 = vand.u32 %v88, 4294901760
    %v1220 = vsub.f32 %v88, %v1219
    %1221 = vmatpush1.msra.mxu0 %v1220
    %1222 = vmatprep.subr.mxu0 0.0
    %v1223 = vand.u32 %v87, 4294901760
    %v1224 = vsub.f32 %v87, %v1223
    %1225 = vmatpush1.msra.mxu0 %v1224
    %1226 = vmatprep.subr.mxu0 0.0
    %v1227 = vand.u32 %v86, 4294901760
    %v1228 = vsub.f32 %v86, %v1227
    %1229 = vmatpush1.msra.mxu0 %v1228
    %1230 = vmatprep.subr.mxu0 0.0
    %v1231 = vand.u32 %v85, 4294901760
    %v1232 = vsub.f32 %v85, %v1231
    %1233 = vmatpush1.msra.mxu0 %v1232
    %1234 = vmatprep.subr.mxu0 0.0
    %v1235 = vand.u32 %v84, 4294901760
    %v1236 = vsub.f32 %v84, %v1235
    %1237 = vmatpush1.msra.mxu0 %v1236
    %1238 = vmatprep.subr.mxu0 0.0
    %v1239 = vand.u32 %v83, 4294901760
    %v1240 = vsub.f32 %v83, %v1239
    %1241 = vmatpush1.msra.mxu0 %v1240
    %1242 = vmatprep.subr.mxu0 0.0
    %v1243 = vand.u32 %v82, 4294901760
    %v1244 = vsub.f32 %v82, %v1243
    %1245 = vmatpush1.msra.mxu0 %v1244
    %1246 = vmatprep.subr.mxu0 0.0
    %v1247 = vand.u32 %v81, 4294901760
    %v1248 = vsub.f32 %v81, %v1247
    %1249 = vmatpush1.msra.mxu0 %v1248
    %1250 = vmatprep.subr.mxu0 0.0
    %v1251 = vand.u32 %v80, 4294901760
    %v1252 = vsub.f32 %v80, %v1251
    %1253 = vmatpush1.msra.mxu0 %v1252
    %1254 = vmatprep.subr.mxu0 0.0
    %v1255 = vand.u32 %v79, 4294901760
    %v1256 = vsub.f32 %v79, %v1255
    %1257 = vmatpush1.msra.mxu0 %v1256
    %1258 = vmatprep.subr.mxu0 0.0
    %v1259 = vand.u32 %v78, 4294901760
    %v1260 = vsub.f32 %v78, %v1259
    %1261 = vmatpush1.msra.mxu0 %v1260
    %1262 = vmatprep.subr.mxu0 0.0
    %1263 = vmatpush2.msra.mxu0 0.0
    %1264 = vmatprep.subr.mxu0 0.0
    %1265 = vmatpush2.msra.mxu0 0.0
    %1266 = vmatprep.subr.mxu0 0.0
    %1267 = vmatpush2.msra.mxu0 0.0
    %1268 = vmatprep.subr.mxu0 0.0
    %1269 = vmatpush2.msra.mxu0 0.0
    %1270 = vmatprep.subr.mxu0 0.0
    %1271 = vmatpush2.msra.mxu0 0.0
    %1272 = vmatprep.subr.mxu0 0.0
    %1273 = vmatpush2.msra.mxu0 0.0
    %1274 = vmatprep.subr.mxu0 0.0
    %1275 = vmatpush2.msra.mxu0 0.0
    %1276 = vmatprep.subr.mxu0 0.0
    %1277 = vmatpush2.msra.mxu0 0.0
    %1278 = vmatprep.subr.mxu0 0.0
    %1279 = vmatpush2.msra.mxu0 0.0
    %1280 = vmatprep.subr.mxu0 0.0
    %1281 = vmatpush2.msra.mxu0 0.0
    %1282 = vmatprep.subr.mxu0 0.0
    %1283 = vmatpush2.msra.mxu0 0.0
    %1284 = vmatprep.subr.mxu0 0.0
    %1285 = vmatpush2.msra.mxu0 0.0
    %1286 = vmatprep.subr.mxu0 0.0
    %1287 = vmatpush2.msra.mxu0 0.0
    %1288 = vmatprep.subr.mxu0 0.0
    %1289 = vmatpush2.msra.mxu0 0.0
    %1290 = vmatprep.subr.mxu0 0.0
    %1291 = vmatpush2.msra.mxu0 0.0
    %1292 = vmatprep.subr.mxu0 0.0
    %1293 = vmatpush2.msra.mxu0 0.0
    %1294 = vmatprep.mubr.f32.mxu0 0.0
    %v1295 = vand.u32 %v42, 4294901760
    %v1296 = vsub.f32 %v42, %v1295
    %1297 = vmatmul.mubr.f32.gmra.mxu0 %v1296
    %v1298 = vpop.f32.mrf.mxu0
    %v1299 = vadd.f32 %v1195, %v1298
    %v1300 = vpop.f32.mrf.mxu0
    %1301 = vdwg.mxu0
    %1302 = vmatprep.subr.mxu0 0.0
    %v1303 = vand.u32 %v93, 4294901760
    %1304 = vmatpush1.msra.mxu0 %v1303
    %1305 = vmatprep.subr.mxu0 0.0
    %v1306 = vand.u32 %v92, 4294901760
    %1307 = vmatpush1.msra.mxu0 %v1306
    %1308 = vmatprep.subr.mxu0 0.0
    %v1309 = vand.u32 %v91, 4294901760
    %1310 = vmatpush1.msra.mxu0 %v1309
    %1311 = vmatprep.subr.mxu0 0.0
    %v1312 = vand.u32 %v90, 4294901760
    %1313 = vmatpush1.msra.mxu0 %v1312
    %1314 = vmatprep.subr.mxu0 0.0
    %v1315 = vand.u32 %v89, 4294901760
    %1316 = vmatpush1.msra.mxu0 %v1315
    %1317 = vmatprep.subr.mxu0 0.0
    %v1318 = vand.u32 %v88, 4294901760
    %1319 = vmatpush1.msra.mxu0 %v1318
    %1320 = vmatprep.subr.mxu0 0.0
    %v1321 = vand.u32 %v87, 4294901760
    %1322 = vmatpush1.msra.mxu0 %v1321
    %1323 = vmatprep.subr.mxu0 0.0
    %v1324 = vand.u32 %v86, 4294901760
    %1325 = vmatpush1.msra.mxu0 %v1324
    %1326 = vmatprep.subr.mxu0 0.0
    %v1327 = vand.u32 %v85, 4294901760
    %1328 = vmatpush1.msra.mxu0 %v1327
    %1329 = vmatprep.subr.mxu0 0.0
    %v1330 = vand.u32 %v84, 4294901760
    %1331 = vmatpush1.msra.mxu0 %v1330
    %1332 = vmatprep.subr.mxu0 0.0
    %v1333 = vand.u32 %v83, 4294901760
    %1334 = vmatpush1.msra.mxu0 %v1333
    %1335 = vmatprep.subr.mxu0 0.0
    %v1336 = vand.u32 %v82, 4294901760
    %1337 = vmatpush1.msra.mxu0 %v1336
    %1338 = vmatprep.subr.mxu0 0.0
    %v1339 = vand.u32 %v81, 4294901760
    %1340 = vmatpush1.msra.mxu0 %v1339
    %1341 = vmatprep.subr.mxu0 0.0
    %v1342 = vand.u32 %v80, 4294901760
    %1343 = vmatpush1.msra.mxu0 %v1342
    %1344 = vmatprep.subr.mxu0 0.0
    %v1345 = vand.u32 %v79, 4294901760
    %1346 = vmatpush1.msra.mxu0 %v1345
    %1347 = vmatprep.subr.mxu0 0.0
    %v1348 = vand.u32 %v78, 4294901760
    %1349 = vmatpush1.msra.mxu0 %v1348
    %1350 = vmatprep.subr.mxu0 0.0
    %1351 = vmatpush2.msra.mxu0 0.0
    %1352 = vmatprep.subr.mxu0 0.0
    %1353 = vmatpush2.msra.mxu0 0.0
    %1354 = vmatprep.subr.mxu0 0.0
    %1355 = vmatpush2.msra.mxu0 0.0
    %1356 = vmatprep.subr.mxu0 0.0
    %1357 = vmatpush2.msra.mxu0 0.0
    %1358 = vmatprep.subr.mxu0 0.0
    %1359 = vmatpush2.msra.mxu0 0.0
    %1360 = vmatprep.subr.mxu0 0.0
    %1361 = vmatpush2.msra.mxu0 0.0
    %1362 = vmatprep.subr.mxu0 0.0
    %1363 = vmatpush2.msra.mxu0 0.0
    %1364 = vmatprep.subr.mxu0 0.0
    %1365 = vmatpush2.msra.mxu0 0.0
    %1366 = vmatprep.subr.mxu0 0.0
    %1367 = vmatpush2.msra.mxu0 0.0
    %1368 = vmatprep.subr.mxu0 0.0
    %1369 = vmatpush2.msra.mxu0 0.0
    %1370 = vmatprep.subr.mxu0 0.0
    %1371 = vmatpush2.msra.mxu0 0.0
    %1372 = vmatprep.subr.mxu0 0.0
    %1373 = vmatpush2.msra.mxu0 0.0
    %1374 = vmatprep.subr.mxu0 0.0
    %1375 = vmatpush2.msra.mxu0 0.0
    %1376 = vmatprep.subr.mxu0 0.0
    %1377 = vmatpush2.msra.mxu0 0.0
    %1378 = vmatprep.subr.mxu0 0.0
    %1379 = vmatpush2.msra.mxu0 0.0
    %1380 = vmatprep.subr.mxu0 0.0
    %1381 = vmatpush2.msra.mxu0 0.0
    %1382 = vmatprep.mubr.f32.mxu0 0.0
    %v1383 = vand.u32 %v42, 4294901760
    %v1384 = vsub.f32 %v42, %v1383
    %v1385 = vand.u32 %v1384, 4294901760
    %1386 = vmatmul.mubr.f32.gmra.mxu0 %v1385
    %v1387 = vpop.f32.mrf.mxu0
    %v1388 = vadd.f32 %v1299, %v1387
    %v1389 = vpop.f32.mrf.mxu0
    %1390 = vdwg.mxu0
    %1391 = vmatprep.subr.mxu0 0.0
    %v1392 = vand.u32 %v93, 4294901760
    %v1393 = vsub.f32 %v93, %v1392
    %v1394 = vand.u32 %v1393, 4294901760
    %1395 = vmatpush1.msra.mxu0 %v1394
    %1396 = vmatprep.subr.mxu0 0.0
    %v1397 = vand.u32 %v92, 4294901760
    %v1398 = vsub.f32 %v92, %v1397
    %v1399 = vand.u32 %v1398, 4294901760
    %1400 = vmatpush1.msra.mxu0 %v1399
    %1401 = vmatprep.subr.mxu0 0.0
    %v1402 = vand.u32 %v91, 4294901760
    %v1403 = vsub.f32 %v91, %v1402
    %v1404 = vand.u32 %v1403, 4294901760
    %1405 = vmatpush1.msra.mxu0 %v1404
    %1406 = vmatprep.subr.mxu0 0.0
    %v1407 = vand.u32 %v90, 4294901760
    %v1408 = vsub.f32 %v90, %v1407
    %v1409 = vand.u32 %v1408, 4294901760
    %1410 = vmatpush1.msra.mxu0 %v1409
    %1411 = vmatprep.subr.mxu0 0.0
    %v1412 = vand.u32 %v89, 4294901760
    %v1413 = vsub.f32 %v89, %v1412
    %v1414 = vand.u32 %v1413, 4294901760
    %1415 = vmatpush1.msra.mxu0 %v1414
    %1416 = vmatprep.subr.mxu0 0.0
    %v1417 = vand.u32 %v88, 4294901760
    %v1418 = vsub.f32 %v88, %v1417
    %v1419 = vand.u32 %v1418, 4294901760
    %1420 = vmatpush1.msra.mxu0 %v1419
    %1421 = vmatprep.subr.mxu0 0.0
    %v1422 = vand.u32 %v87, 4294901760
    %v1423 = vsub.f32 %v87, %v1422
    %v1424 = vand.u32 %v1423, 4294901760
    %1425 = vmatpush1.msra.mxu0 %v1424
    %1426 = vmatprep.subr.mxu0 0.0
    %v1427 = vand.u32 %v86, 4294901760
    %v1428 = vsub.f32 %v86, %v1427
    %v1429 = vand.u32 %v1428, 4294901760
    %1430 = vmatpush1.msra.mxu0 %v1429
    %1431 = vmatprep.subr.mxu0 0.0
    %v1432 = vand.u32 %v85, 4294901760
    %v1433 = vsub.f32 %v85, %v1432
    %v1434 = vand.u32 %v1433, 4294901760
    %1435 = vmatpush1.msra.mxu0 %v1434
    %1436 = vmatprep.subr.mxu0 0.0
    %v1437 = vand.u32 %v84, 4294901760
    %v1438 = vsub.f32 %v84, %v1437
    %v1439 = vand.u32 %v1438, 4294901760
    %1440 = vmatpush1.msra.mxu0 %v1439
    %1441 = vmatprep.subr.mxu0 0.0
    %v1442 = vand.u32 %v83, 4294901760
    %v1443 = vsub.f32 %v83, %v1442
    %v1444 = vand.u32 %v1443, 4294901760
    %1445 = vmatpush1.msra.mxu0 %v1444
    %1446 = vmatprep.subr.mxu0 0.0
    %v1447 = vand.u32 %v82, 4294901760
    %v1448 = vsub.f32 %v82, %v1447
    %v1449 = vand.u32 %v1448, 4294901760
    %1450 = vmatpush1.msra.mxu0 %v1449
    %1451 = vmatprep.subr.mxu0 0.0
    %v1452 = vand.u32 %v81, 4294901760
    %v1453 = vsub.f32 %v81, %v1452
    %v1454 = vand.u32 %v1453, 4294901760
    %1455 = vmatpush1.msra.mxu0 %v1454
    %1456 = vmatprep.subr.mxu0 0.0
    %v1457 = vand.u32 %v80, 4294901760
    %v1458 = vsub.f32 %v80, %v1457
    %v1459 = vand.u32 %v1458, 4294901760
    %1460 = vmatpush1.msra.mxu0 %v1459
    %1461 = vmatprep.subr.mxu0 0.0
    %v1462 = vand.u32 %v79, 4294901760
    %v1463 = vsub.f32 %v79, %v1462
    %v1464 = vand.u32 %v1463, 4294901760
    %1465 = vmatpush1.msra.mxu0 %v1464
    %1466 = vmatprep.subr.mxu0 0.0
    %v1467 = vand.u32 %v78, 4294901760
    %v1468 = vsub.f32 %v78, %v1467
    %v1469 = vand.u32 %v1468, 4294901760
    %1470 = vmatpush1.msra.mxu0 %v1469
    %1471 = vmatprep.subr.mxu0 0.0
    %1472 = vmatpush2.msra.mxu0 0.0
    %1473 = vmatprep.subr.mxu0 0.0
    %1474 = vmatpush2.msra.mxu0 0.0
    %1475 = vmatprep.subr.mxu0 0.0
    %1476 = vmatpush2.msra.mxu0 0.0
    %1477 = vmatprep.subr.mxu0 0.0
    %1478 = vmatpush2.msra.mxu0 0.0
    %1479 = vmatprep.subr.mxu0 0.0
    %1480 = vmatpush2.msra.mxu0 0.0
    %1481 = vmatprep.subr.mxu0 0.0
    %1482 = vmatpush2.msra.mxu0 0.0
    %1483 = vmatprep.subr.mxu0 0.0
    %1484 = vmatpush2.msra.mxu0 0.0
    %1485 = vmatprep.subr.mxu0 0.0
    %1486 = vmatpush2.msra.mxu0 0.0
    %1487 = vmatprep.subr.mxu0 0.0
    %1488 = vmatpush2.msra.mxu0 0.0
    %1489 = vmatprep.subr.mxu0 0.0
    %1490 = vmatpush2.msra.mxu0 0.0
    %1491 = vmatprep.subr.mxu0 0.0
    %1492 = vmatpush2.msra.mxu0 0.0
    %1493 = vmatprep.subr.mxu0 0.0
    %1494 = vmatpush2.msra.mxu0 0.0
    %1495 = vmatprep.subr.mxu0 0.0
    %1496 = vmatpush2.msra.mxu0 0.0
    %1497 = vmatprep.subr.mxu0 0.0
    %1498 = vmatpush2.msra.mxu0 0.0
    %1499 = vmatprep.subr.mxu0 0.0
    %1500 = vmatpush2.msra.mxu0 0.0
    %1501 = vmatprep.subr.mxu0 0.0
    %1502 = vmatpush2.msra.mxu0 0.0
    %1503 = vmatprep.mubr.f32.mxu0 0.0
    %v1504 = vand.u32 %v42, 4294901760
    %1505 = vmatmul.mubr.f32.gmra.mxu0 %v1504
    %v1506 = vpop.f32.mrf.mxu0
    %v1507 = vadd.f32 %v1388, %v1506
    %v1508 = vpop.f32.mrf.mxu0
    %1509 = vdwg.mxu0
    %1510 = vmatprep.subr.mxu0 0.0
    %v1511 = vand.u32 %v93, 4294901760
    %1512 = vmatpush1.msra.mxu0 %v1511
    %1513 = vmatprep.subr.mxu0 0.0
    %v1514 = vand.u32 %v92, 4294901760
    %1515 = vmatpush1.msra.mxu0 %v1514
    %1516 = vmatprep.subr.mxu0 0.0
    %v1517 = vand.u32 %v91, 4294901760
    %1518 = vmatpush1.msra.mxu0 %v1517
    %1519 = vmatprep.subr.mxu0 0.0
    %v1520 = vand.u32 %v90, 4294901760
    %1521 = vmatpush1.msra.mxu0 %v1520
    %1522 = vmatprep.subr.mxu0 0.0
    %v1523 = vand.u32 %v89, 4294901760
    %1524 = vmatpush1.msra.mxu0 %v1523
    %1525 = vmatprep.subr.mxu0 0.0
    %v1526 = vand.u32 %v88, 4294901760
    %1527 = vmatpush1.msra.mxu0 %v1526
    %1528 = vmatprep.subr.mxu0 0.0
    %v1529 = vand.u32 %v87, 4294901760
    %1530 = vmatpush1.msra.mxu0 %v1529
    %1531 = vmatprep.subr.mxu0 0.0
    %v1532 = vand.u32 %v86, 4294901760
    %1533 = vmatpush1.msra.mxu0 %v1532
    %1534 = vmatprep.subr.mxu0 0.0
    %v1535 = vand.u32 %v85, 4294901760
    %1536 = vmatpush1.msra.mxu0 %v1535
    %1537 = vmatprep.subr.mxu0 0.0
    %v1538 = vand.u32 %v84, 4294901760
    %1539 = vmatpush1.msra.mxu0 %v1538
    %1540 = vmatprep.subr.mxu0 0.0
    %v1541 = vand.u32 %v83, 4294901760
    %1542 = vmatpush1.msra.mxu0 %v1541
    %1543 = vmatprep.subr.mxu0 0.0
    %v1544 = vand.u32 %v82, 4294901760
    %1545 = vmatpush1.msra.mxu0 %v1544
    %1546 = vmatprep.subr.mxu0 0.0
    %v1547 = vand.u32 %v81, 4294901760
    %1548 = vmatpush1.msra.mxu0 %v1547
    %1549 = vmatprep.subr.mxu0 0.0
    %v1550 = vand.u32 %v80, 4294901760
    %1551 = vmatpush1.msra.mxu0 %v1550
    %1552 = vmatprep.subr.mxu0 0.0
    %v1553 = vand.u32 %v79, 4294901760
    %1554 = vmatpush1.msra.mxu0 %v1553
    %1555 = vmatprep.subr.mxu0 0.0
    %v1556 = vand.u32 %v78, 4294901760
    %1557 = vmatpush1.msra.mxu0 %v1556
    %1558 = vmatprep.subr.mxu0 0.0
    %1559 = vmatpush2.msra.mxu0 0.0
    %1560 = vmatprep.subr.mxu0 0.0
    %1561 = vmatpush2.msra.mxu0 0.0
    %1562 = vmatprep.subr.mxu0 0.0
    %1563 = vmatpush2.msra.mxu0 0.0
    %1564 = vmatprep.subr.mxu0 0.0
    %1565 = vmatpush2.msra.mxu0 0.0
    %1566 = vmatprep.subr.mxu0 0.0
    %1567 = vmatpush2.msra.mxu0 0.0
    %1568 = vmatprep.subr.mxu0 0.0
    %1569 = vmatpush2.msra.mxu0 0.0
    %1570 = vmatprep.subr.mxu0 0.0
    %1571 = vmatpush2.msra.mxu0 0.0
    %1572 = vmatprep.subr.mxu0 0.0
    %1573 = vmatpush2.msra.mxu0 0.0
    %1574 = vmatprep.subr.mxu0 0.0
    %1575 = vmatpush2.msra.mxu0 0.0
    %1576 = vmatprep.subr.mxu0 0.0
    %1577 = vmatpush2.msra.mxu0 0.0
    %1578 = vmatprep.subr.mxu0 0.0
    %1579 = vmatpush2.msra.mxu0 0.0
    %1580 = vmatprep.subr.mxu0 0.0
    %1581 = vmatpush2.msra.mxu0 0.0
    %1582 = vmatprep.subr.mxu0 0.0
    %1583 = vmatpush2.msra.mxu0 0.0
    %1584 = vmatprep.subr.mxu0 0.0
    %1585 = vmatpush2.msra.mxu0 0.0
    %1586 = vmatprep.subr.mxu0 0.0
    %1587 = vmatpush2.msra.mxu0 0.0
    %1588 = vmatprep.subr.mxu0 0.0
    %1589 = vmatpush2.msra.mxu0 0.0
    %1590 = vmatprep.mubr.f32.mxu0 0.0
    %v1591 = vand.u32 %v42, 4294901760
    %1592 = vmatmul.mubr.f32.gmra.mxu0 %v1591
    %v1593 = vpop.f32.mrf.mxu0
    %v1594 = vadd.f32 %v1507, %v1593
    %v1595 = vpop.f32.mrf.mxu0
    %1596 = vdwg.mxu0
    %1597 = vst [vmem:[#allocation7] sm:$0xff] %v1594
    // Predicated region
    $region18: #{tpu_custom_call.1} parent=1 // pred_check
      _
    $region19: #{tpu_custom_call.1} parent=1 // pred_check_branch
      %1599 = sbr.rel (0) target = $region21
    $region20: #{tpu_custom_call.1} parent=1 // pred_region
      %s1601 = ssub.s32 128, 128
      %1602 = vsyncadd [#allocation4], %s1601
      %s1604 = sshll.u32 [#allocation7], 4
      %s1605 = int_to_ptr.vmem [resolvable:$true] %s1604
      %1607 = dma.vmem_to_hbm [thread:$0]  %s1605, 128, %s2, [#allocation4]
    $region21: #{tpu_custom_call.1} parent=1 // pred_fallthru
      _
    // Predicated region
    $region22: #{tpu_custom_call.1} parent=1 // pred_check
      _
    $region23: #{tpu_custom_call.1} parent=1 // pred_check_branch
      %1609 = sbr.rel (0) target = $region25
    $region24: #{tpu_custom_call.1} parent=1 // pred_region
      %1610 = dma.done [#allocation4], 128
    $region25: #{tpu_custom_call.1} parent=1 // pred_fallthru
      _
    %1611 = vsyncpa [#allocation3], 1
    %1612 = vsyncpa [#allocation6], 1
    %1613 = vsyncpa [#allocation4], 1

</llo_original>
